<compile_context>
chip_gen: v5e
topology: v5e:2x2
jax: 0.10.0
libtpu: 0.0.40
codegen_flags: <defaults>
</compile_context>

<pallas_src>
import jax
import jax.numpy as jnp
from jax import lax
from jax.experimental import pallas as pl
from jax.experimental.pallas import tpu as pltpu


def _round_up(x, m):
    return ((x + m - 1) // m) * m


def _gau_kernel(zf_ref, xf_ref, mask_ref,
                wx_ref, wf_ref, wb_ref,
                bxg_ref, bfg_ref, bbg_ref,
                wfif_ref, wfib_ref, wfix_ref, bfi_ref,
                out_ref, zcache_ref):
    bf16 = jnp.bfloat16
    C = wx_ref.shape[1]

    def l2n(x):
        # F.normalize(dim=1): x / max(||x||, 1e-12)  ==  x * rsqrt(max(||x||^2, 1e-24))
        inv = lax.rsqrt(jnp.maximum(jnp.sum(x * x, axis=0, keepdims=True), 1e-24))
        return x * inv

    # ---- zf-side branch: computed once per batch element (first Nx tile), cached in VMEM ----
    @pl.when(pl.program_id(1) == 0)
    def _():
        zf = zf_ref[0]                       # (C, Nzp)  f32
        mask = mask_ref[0]                   # (1, Nzp)  f32
        zf_fore = (zf * mask).astype(bf16)
        zf_back = (zf * (1.0 - mask)).astype(bf16)
        # fused [w_fs; w_fg] / [w_bs; w_bg] 1x1-conv projections (bf16 operands, f32 MXU acc)
        proj_f = jnp.dot(wf_ref[...], zf_fore, preferred_element_type=jnp.float32)   # (2C, Nzp)
        proj_b = jnp.dot(wb_ref[...], zf_back, preferred_element_type=jnp.float32)   # (2C, Nzp)
        zcache_ref[0 * C:1 * C, :] = l2n(proj_f[:C]).astype(bf16)                              # zs_f
        zcache_ref[1 * C:2 * C, :] = jnp.maximum(proj_f[C:] + bfg_ref[...], 0.0).astype(bf16)  # zg_f
        zcache_ref[2 * C:3 * C, :] = l2n(proj_b[:C]).astype(bf16)                              # zs_b
        zcache_ref[3 * C:4 * C, :] = jnp.maximum(proj_b[C:] + bbg_ref[...], 0.0).astype(bf16)  # zg_b

    # ---- xf side: one fused [w_fq; w_bq; w_xg] projection per tile (xf is already bf16) ----
    xf = xf_ref[0]                                                            # (C, TNX) bf16
    proj_x = jnp.dot(wx_ref[...], xf, preferred_element_type=jnp.float32)     # (3C, TNX) f32
    xq_f = l2n(proj_x[0 * C:1 * C]).astype(bf16)
    xq_b = l2n(proj_x[1 * C:2 * C]).astype(bf16)
    xg = jnp.maximum(proj_x[2 * C:3 * C] + bxg_ref[...], 0.0).astype(bf16)    # conv+BN(folded)+ReLU

    def branch(zs, zg, xq, wfi_blk_ref):
        # similar^T[m, n] = sum_c zs[c, m] * xq[c, n]   -> (Nzp, TNX)
        sim_t = lax.dot_general(zs, xq, (((0,), (0,)), ((), ())),
                                preferred_element_type=jnp.float32)
        # embedding[c, n] = sum_m zg[c, m] * similar[n, m]
        ebd = jnp.dot(zg, sim_t.astype(bf16), preferred_element_type=jnp.float32)     # (C, TNX)
        # this branch's slice of fi(): no (3C, TNX) concat scratch round trip
        return jnp.dot(wfi_blk_ref[...], ebd.astype(bf16),
                       preferred_element_type=jnp.float32)                            # (Cout, TNX)

    out = (branch(zcache_ref[0 * C:1 * C, :], zcache_ref[1 * C:2 * C, :], xq_f, wfif_ref)
           + branch(zcache_ref[2 * C:3 * C, :], zcache_ref[3 * C:4 * C, :], xq_b, wfib_ref)
           + jnp.dot(wfix_ref[...], xg, preferred_element_type=jnp.float32)
           + bfi_ref[...])
    out_ref[0] = jnp.maximum(out, 0.0)


def graph_attention_union(zf, xf, zf_mask, params, *, tnx=512):
    """zf: (B,C,Hz,Wz), xf: (B,C,Hx,Wx), zf_mask: (B,1,Hz,Wz)  (NCHW, float32)."""
    B, C, Hz, Wz = zf.shape
    _, _, Hx, Wx = xf.shape
    Nz, Nx = Hz * Wz, Hx * Wx
    Cout = params["w_fi"].shape[0]

    f32, bf16 = jnp.float32, jnp.bfloat16

    # lane-dense padding (multiples of 128); zero columns are semantically inert.
    Nzp = _round_up(Nz, 128)
    Nxp128 = _round_up(Nx, 128)
    tnx = min(tnx, Nxp128)
    Nxp = _round_up(Nxp128, tnx)

    zf_f = jnp.pad(zf.reshape(B, C, Nz).astype(f32), ((0, 0), (0, 0), (0, Nzp - Nz)))
    mask_f = jnp.pad(zf_mask.reshape(B, 1, Nz).astype(f32), ((0, 0), (0, 0), (0, Nzp - Nz)))
    # xf only ever feeds the MXU -> ship it as bf16 (half the dominant HBM stream).
    xf_b = jnp.pad(xf.reshape(B, C, Nx).astype(bf16), ((0, 0), (0, 0), (0, Nxp - Nx)))

    # host-side weight stacking / splitting + bf16 cast (MXU operands)
    w_x = jnp.concatenate([params["w_fq"], params["w_bq"], params["w_xg"]], 0).astype(bf16)  # (3C, C)
    w_f = jnp.concatenate([params["w_fs"], params["w_fg"]], 0).astype(bf16)                  # (2C, C)
    w_b = jnp.concatenate([params["w_bs"], params["w_bg"]], 0).astype(bf16)                  # (2C, C)
    w_fi = params["w_fi"].astype(bf16)                                                       # (Cout, 3C)
    w_fi_f = w_fi[:, 0 * C:1 * C]                                                            # (Cout, C)
    w_fi_b = w_fi[:, 1 * C:2 * C]
    w_fi_x = w_fi[:, 2 * C:3 * C]
    b_xg = params["b_xg"].astype(f32)
    b_fg = params["b_fg"].astype(f32)
    b_bg = params["b_bg"].astype(f32)
    b_fi = params["b_fi"].astype(f32)

    n_tiles = Nxp // tnx
    grid = (B, n_tiles)

    def fixed(shape):
        return pl.BlockSpec(shape, lambda b, n: (0, 0))

    in_specs = [
        pl.BlockSpec((1, C, Nzp), lambda b, n: (b, 0, 0)),   # zf        (f32)
        pl.BlockSpec((1, C, tnx), lambda b, n: (b, 0, n)),   # xf        (bf16, tiled over Nx)
        pl.BlockSpec((1, 1, Nzp), lambda b, n: (b, 0, 0)),   # zf_mask   (f32)
        fixed((3 * C, C)), fixed((2 * C, C)), fixed((2 * C, C)),   # stacked projection weights
        fixed((C, 1)), fixed((C, 1)), fixed((C, 1)),               # g-branch biases
        fixed((Cout, C)), fixed((Cout, C)), fixed((Cout, C)),      # fi weight split by branch
        fixed((Cout, 1)),                                          # fi bias
    ]

    per_tile_flops = 2 * (3 * C * C * tnx          # fused xf projection
                          + 2 * Nzp * C * tnx      # two similarity matmuls
                          + 2 * C * Nzp * tnx      # two embedding matmuls
                          + 3 * Cout * C * tnx)    # fi epilogue (3 branch dots)
    per_b_flops = 2 * (2 * (2 * C) * C * Nzp)      # fore/back zf projections (once per b)
    cost = pl.CostEstimate(
        flops=B * n_tiles * per_tile_flops + B * per_b_flops,
        transcendentals=B * (n_tiles * 2 * tnx + 2 * Nzp),     # rsqrt lanes in L2 normalizes
        bytes_accessed=(4 * (B * C * Nzp + B * Nzp)            # zf + mask (f32)
                        + 2 * B * C * Nxp                      # xf (bf16)
                        + 4 * B * Cout * Nxp                   # output (f32)
                        + 2 * (3 * C * C + 2 * 2 * C * C + 3 * Cout * C)   # bf16 weights
                        + 4 * (3 * C + Cout)))                 # f32 biases

    out = pl.pallas_call(
        _gau_kernel,
        out_shape=jax.ShapeDtypeStruct((B, Cout, Nxp), f32),
        grid_spec=pltpu.PrefetchScalarGridSpec(
            num_scalar_prefetch=0,
            grid=grid,
            in_specs=in_specs,
            out_specs=pl.BlockSpec((1, Cout, tnx), lambda b, n: (b, 0, n)),
            scratch_shapes=[pltpu.VMEM((4 * C, Nzp), bf16)],   # per-b cache: zs_f/zg_f/zs_b/zg_b
        ),
        # batch axis parallel (megacore / v7x dual-TC when B >= 2); Nx axis must be
        # "arbitrary" because the zf-branch cache is filled at n == 0 and reused at n > 0.
        compiler_params=pltpu.CompilerParams(
            dimension_semantics=("parallel", "arbitrary")),
        cost_estimate=cost,
    )(zf_f, xf_b, mask_f, w_x, w_f, w_b, b_xg, b_fg, b_bg, w_fi_f, w_fi_b, w_fi_x, b_fi)

    # padded Nx columns hold ReLU(w_fi_x·ReLU(b_xg)+b_fi) garbage -> always slice before use.
    return out[:, :, :Nx].reshape(B, Cout, Hx, Wx)


def init_params(key, C, Cout):
    """Deterministic synthetic weights. BN params are folded into conv weight/bias."""
    keys = jax.random.split(key, 8)

    def conv_nobias(k, co, ci):
        return (jax.random.normal(k, (co, ci), jnp.float32) / jnp.sqrt(ci)).astype(jnp.float32)

    def fold_conv_bn(k, co, ci):
        ks = jax.random.split(k, 6)
        w = jax.random.normal(ks[0], (co, ci), jnp.float32) / jnp.sqrt(ci)
        b = 0.1 * jax.random.normal(ks[1], (co,), jnp.float32)
        gamma = 1.0 + 0.1 * jax.random.normal(ks[2], (co,), jnp.float32)
        beta = 0.1 * jax.random.normal(ks[3], (co,), jnp.float32)
        mean = 0.1 * jax.random.normal(ks[4], (co,), jnp.float32)
        var = 0.5 + jnp.abs(jax.random.normal(ks[5], (co,), jnp.float32))
        scale = gamma / jnp.sqrt(var + 1e-5)
        w_f = (w * scale[:, None]).astype(jnp.float32)
        b_f = (scale * (b - mean) + beta)[:, None].astype(jnp.float32)   # (co, 1)
        return w_f, b_f

    w_fg, b_fg = fold_conv_bn(keys[2], C, C)
    w_bg, b_bg = fold_conv_bn(keys[5], C, C)
    w_xg, b_xg = fold_conv_bn(keys[6], C, C)
    w_fi, b_fi = fold_conv_bn(keys[7], Cout, 3 * C)

    return dict(
        w_fq=conv_nobias(keys[0], C, C), w_fs=conv_nobias(keys[1], C, C),
        w_fg=w_fg, b_fg=b_fg,
        w_bq=conv_nobias(keys[3], C, C), w_bs=conv_nobias(keys[4], C, C),
        w_bg=w_bg, b_bg=b_bg,
        w_xg=w_xg, b_xg=b_xg,
        w_fi=w_fi, b_fi=b_fi,
    )


def reference(zf, xf, zf_mask, p):
    """Pure-JAX reference mirroring the PyTorch NCHW semantics.

    Matmul operands are quantized to bf16 (with f32 accumulation) to match the kernel's
    MXU operand precision; everything else is f32, exactly as in the kernel.
    """
    bf16, f32 = jnp.bfloat16, jnp.float32
    zf_fore = zf * zf_mask
    zf_back = zf * (1.0 - zf_mask)

    def conv(w, x, b=None):
        y = jnp.einsum('oc,bchw->bohw', w.astype(bf16), x.astype(bf16),
                       preferred_element_type=f32)
        if b is not None:
            y = y + b.reshape(1, -1, 1, 1)
        return y

    def norm(x):
        n = jnp.sqrt(jnp.sum(x * x, axis=1, keepdims=True))
        return x / jnp.maximum(n, 1e-12)

    def calc(zfx, wq, ws, wg, bg):
        xq = norm(conv(wq, xf))
        zs = norm(conv(ws, zfx))
        zg = jax.nn.relu(conv(wg, zfx, bg))
        B, C, Hx, Wx = xq.shape
        xqf = xq.reshape(B, C, -1).astype(bf16)
        zsf = zs.reshape(B, C, -1).astype(bf16)
        zgf = zg.reshape(B, C, -1).astype(bf16)
        sim = jnp.einsum('bcn,bcm->bnm', xqf, zsf, preferred_element_type=f32)
        ebd = jnp.einsum('bcm,bnm->bcn', zgf, sim.astype(bf16),
                         preferred_element_type=f32)
        return ebd.reshape(B, C, Hx, Wx)

    e1 = calc(zf_fore, p['w_fq'], p['w_fs'], p['w_fg'], p['b_fg'][:, 0])
    e2 = calc(zf_back, p['w_bq'], p['w_bs'], p['w_bg'], p['b_bg'][:, 0])
    xg = jax.nn.relu(conv(p['w_xg'], xf, p['b_xg'][:, 0]))
    cat = jnp.concatenate([e1, e2, xg], axis=1)
    return jax.nn.relu(conv(p['w_fi'], cat, p['b_fi'][:, 0]))


if __name__ == "__main__":
    key = jax.random.PRNGKey(0)
    B, C, Cout = 2, 32, 32      # cfg.TRAIN.CHANNEL_NUM used for both in/out channels
    Hz = Wz = 8                 # template feature map (zf)
    Hx = Wx = 16                # search feature map (xf)

    kz, kx, km, kp = jax.random.split(key, 4)
    zf = jax.random.normal(kz, (B, C, Hz, Wz), jnp.float32)
    xf = jax.random.normal(kx, (B, C, Hx, Wx), jnp.float32)
    zf_mask = jax.random.uniform(km, (B, 1, Hz, Wz), jnp.float32)

    params = init_params(kp, C, Cout)

    out = graph_attention_union(zf, xf, zf_mask, params)
    out = jax.block_until_ready(out)

    ref = reference(zf, xf, zf_mask, params)
    assert out.shape == (B, Cout, Hx, Wx), out.shape
    # tolerance covers accumulation-order / rsqrt rounding differences only
    # (the reference uses the same bf16 MXU-operand precision as the kernel).
    assert jnp.allclose(out, ref, atol=5e-3, rtol=5e-3), float(jnp.max(jnp.abs(out - ref)))
    print("KERNEL_OK")
</pallas_src>

<mosaic_0001>
module attributes {stable_mosaic.version = 11 : i64} {
  func.func @_gau_kernel(%arg0: i32, %arg1: i32, %arg2: memref<1x32x128xf32, #tpu.memory_space<vmem>>, %arg3: memref<1x32x256xbf16, #tpu.memory_space<vmem>>, %arg4: memref<1x1x128xf32, #tpu.memory_space<vmem>>, %arg5: memref<96x32xbf16, #tpu.memory_space<vmem>>, %arg6: memref<64x32xbf16, #tpu.memory_space<vmem>>, %arg7: memref<64x32xbf16, #tpu.memory_space<vmem>>, %arg8: memref<32x1xf32, #tpu.memory_space<vmem>>, %arg9: memref<32x1xf32, #tpu.memory_space<vmem>>, %arg10: memref<32x1xf32, #tpu.memory_space<vmem>>, %arg11: memref<32x32xbf16, #tpu.memory_space<vmem>>, %arg12: memref<32x32xbf16, #tpu.memory_space<vmem>>, %arg13: memref<32x32xbf16, #tpu.memory_space<vmem>>, %arg14: memref<32x1xf32, #tpu.memory_space<vmem>>, %arg15: memref<1x32x256xf32, #tpu.memory_space<vmem>>, %arg16: memref<128x128xbf16, #tpu.memory_space<vmem>>) attributes {dimension_semantics = [#tpu.dimension_semantics<parallel>, #tpu.dimension_semantics<arbitrary>], iteration_bounds = array<i64: 2, 1>, scalar_prefetch = 0 : i64, scratch_operands = 1 : i64, tpu.core_type = #tpu.core_type<tc>, window_params = [{transform_indices = @transform_0, window_bounds = array<i64: 1, 32, 128>}, {transform_indices = @transform_1, window_bounds = array<i64: 1, 32, 256>}, {transform_indices = @transform_2, window_bounds = array<i64: 1, 1, 128>}, {pipeline_mode = #tpu.pipeline_mode<synchronous>, transform_indices = @transform_3, window_bounds = array<i64: 96, 32>}, {pipeline_mode = #tpu.pipeline_mode<synchronous>, transform_indices = @transform_4, window_bounds = array<i64: 64, 32>}, {pipeline_mode = #tpu.pipeline_mode<synchronous>, transform_indices = @transform_5, window_bounds = array<i64: 64, 32>}, {pipeline_mode = #tpu.pipeline_mode<synchronous>, transform_indices = @transform_6, window_bounds = array<i64: 32, 1>}, {pipeline_mode = #tpu.pipeline_mode<synchronous>, transform_indices = @transform_7, window_bounds = array<i64: 32, 1>}, {pipeline_mode = #tpu.pipeline_mode<synchronous>, transform_indices = @transform_8, window_bounds = array<i64: 32, 1>}, {pipeline_mode = #tpu.pipeline_mode<synchronous>, transform_indices = @transform_9, window_bounds = array<i64: 32, 32>}, {pipeline_mode = #tpu.pipeline_mode<synchronous>, transform_indices = @transform_10, window_bounds = array<i64: 32, 32>}, {pipeline_mode = #tpu.pipeline_mode<synchronous>, transform_indices = @transform_11, window_bounds = array<i64: 32, 32>}, {pipeline_mode = #tpu.pipeline_mode<synchronous>, transform_indices = @transform_12, window_bounds = array<i64: 32, 1>}, {transform_indices = @transform_13, window_bounds = array<i64: 1, 32, 256>}]} {
    %c0_i32 = arith.constant 0 : i32
    %0 = arith.cmpi eq, %arg1, %c0_i32 : i32
    %1 = arith.extui %0 : i1 to i32
    %c0_i32_0 = arith.constant 0 : i32
    %2 = arith.cmpi ne, %1, %c0_i32_0 : i32
    scf.if %2 {
      %c0_36 = arith.constant 0 : index
      %c0_37 = arith.constant 0 : index
      %c0_38 = arith.constant 0 : index
      %62 = vector.load %arg2[%c0_36, %c0_37, %c0_38] : memref<1x32x128xf32, #tpu.memory_space<vmem>>, vector<1x32x128xf32>
      %63 = vector.shape_cast %62 : vector<1x32x128xf32> to vector<32x128xf32>
      %c0_39 = arith.constant 0 : index
      %c0_40 = arith.constant 0 : index
      %c0_41 = arith.constant 0 : index
      %64 = vector.load %arg4[%c0_39, %c0_40, %c0_41] : memref<1x1x128xf32, #tpu.memory_space<vmem>>, vector<1x1x128xf32>
      %65 = vector.shape_cast %64 : vector<1x1x128xf32> to vector<1x128xf32>
      %66 = vector.broadcast %65 : vector<1x128xf32> to vector<32x128xf32>
      %67 = arith.mulf %63, %66 : vector<32x128xf32>
      %68 = arith.truncf %67 : vector<32x128xf32> to vector<32x128xbf16>
      %cst_42 = arith.constant 1.000000e+00 : f32
      %69 = vector.broadcast %cst_42 : f32 to vector<1x128xf32>
      %70 = arith.subf %69, %65 : vector<1x128xf32>
      %71 = vector.broadcast %70 : vector<1x128xf32> to vector<32x128xf32>
      %72 = arith.mulf %63, %71 : vector<32x128xf32>
      %73 = arith.truncf %72 : vector<32x128xf32> to vector<32x128xbf16>
      %c0_43 = arith.constant 0 : index
      %c0_44 = arith.constant 0 : index
      %74 = vector.load %arg6[%c0_43, %c0_44] : memref<64x32xbf16, #tpu.memory_space<vmem>>, vector<64x32xbf16>
      %cst_45 = arith.constant dense<0.000000e+00> : vector<64x128xf32>
      %75 = tpu.matmul %74, %68, %cst_45 {dimension_numbers = #tpu.dot_dimension_numbers<[1], [0], [0], [1], [0, 0, 1, 1], [], []>} : vector<64x32xbf16>, vector<32x128xbf16>, vector<64x128xf32> -> vector<64x128xf32>
      %c0_46 = arith.constant 0 : index
      %c0_47 = arith.constant 0 : index
      %76 = vector.load %arg7[%c0_46, %c0_47] : memref<64x32xbf16, #tpu.memory_space<vmem>>, vector<64x32xbf16>
      %cst_48 = arith.constant dense<0.000000e+00> : vector<64x128xf32>
      %77 = tpu.matmul %76, %73, %cst_48 {dimension_numbers = #tpu.dot_dimension_numbers<[1], [0], [0], [1], [0, 0, 1, 1], [], []>} : vector<64x32xbf16>, vector<32x128xbf16>, vector<64x128xf32> -> vector<64x128xf32>
      %78 = vector.extract_strided_slice %75 {offsets = [0, 0], sizes = [32, 128], strides = [1, 1]} : vector<64x128xf32> to vector<32x128xf32>
      %79 = arith.mulf %78, %78 : vector<32x128xf32>
      %cst_49 = arith.constant dense<0.000000e+00> : vector<128xf32>
      %80 = vector.multi_reduction <add>, %79, %cst_49 [0] : vector<32x128xf32> to vector<128xf32>
      %81 = vector.shape_cast %80 : vector<128xf32> to vector<1x128xf32>
      %cst_50 = arith.constant 1.000000e-24 : f32
      %82 = vector.broadcast %cst_50 : f32 to vector<1x128xf32>
      %83 = arith.maximumf %81, %82 : vector<1x128xf32>
      %84 = math.rsqrt %83 : vector<1x128xf32>
      %85 = vector.broadcast %84 : vector<1x128xf32> to vector<32x128xf32>
      %86 = arith.mulf %78, %85 : vector<32x128xf32>
      %87 = arith.truncf %86 : vector<32x128xf32> to vector<32x128xbf16>
      %c0_51 = arith.constant 0 : index
      %c0_52 = arith.constant 0 : index
      %88 = vector.load %arg16[%c0_51, %c0_52] : memref<128x128xbf16, #tpu.memory_space<vmem>>, vector<32x128xbf16>
      tpu.vector_store %arg16[%c0_51, %c0_52], %87 {strides = array<i32>} : memref<128x128xbf16, #tpu.memory_space<vmem>>, vector<32x128xbf16>,
      %89 = vector.extract_strided_slice %75 {offsets = [32, 0], sizes = [32, 128], strides = [1, 1]} : vector<64x128xf32> to vector<32x128xf32>
      %c0_53 = arith.constant 0 : index
      %c0_54 = arith.constant 0 : index
      %90 = vector.load %arg9[%c0_53, %c0_54] : memref<32x1xf32, #tpu.memory_space<vmem>>, vector<32x1xf32>
      %91 = vector.broadcast %90 : vector<32x1xf32> to vector<32x128xf32>
      %92 = arith.addf %89, %91 : vector<32x128xf32>
      %cst_55 = arith.constant 0.000000e+00 : f32
      %93 = vector.broadcast %cst_55 : f32 to vector<32x128xf32>
      %94 = arith.maximumf %92, %93 : vector<32x128xf32>
      %95 = arith.truncf %94 : vector<32x128xf32> to vector<32x128xbf16>
      %c32_56 = arith.constant 32 : index
      %c0_57 = arith.constant 0 : index
      %96 = vector.load %arg16[%c32_56, %c0_57] : memref<128x128xbf16, #tpu.memory_space<vmem>>, vector<32x128xbf16>
      tpu.vector_store %arg16[%c32_56, %c0_57], %95 {strides = array<i32>} : memref<128x128xbf16, #tpu.memory_space<vmem>>, vector<32x128xbf16>,
      %97 = vector.extract_strided_slice %77 {offsets = [0, 0], sizes = [32, 128], strides = [1, 1]} : vector<64x128xf32> to vector<32x128xf32>
      %98 = arith.mulf %97, %97 : vector<32x128xf32>
      %cst_58 = arith.constant dense<0.000000e+00> : vector<128xf32>
      %99 = vector.multi_reduction <add>, %98, %cst_58 [0] : vector<32x128xf32> to vector<128xf32>
      %100 = vector.shape_cast %99 : vector<128xf32> to vector<1x128xf32>
      %cst_59 = arith.constant 1.000000e-24 : f32
      %101 = vector.broadcast %cst_59 : f32 to vector<1x128xf32>
      %102 = arith.maximumf %100, %101 : vector<1x128xf32>
      %103 = math.rsqrt %102 : vector<1x128xf32>
      %104 = vector.broadcast %103 : vector<1x128xf32> to vector<32x128xf32>
      %105 = arith.mulf %97, %104 : vector<32x128xf32>
      %106 = arith.truncf %105 : vector<32x128xf32> to vector<32x128xbf16>
      %c64_60 = arith.constant 64 : index
      %c0_61 = arith.constant 0 : index
      %107 = vector.load %arg16[%c64_60, %c0_61] : memref<128x128xbf16, #tpu.memory_space<vmem>>, vector<32x128xbf16>
      tpu.vector_store %arg16[%c64_60, %c0_61], %106 {strides = array<i32>} : memref<128x128xbf16, #tpu.memory_space<vmem>>, vector<32x128xbf16>,
      %108 = vector.extract_strided_slice %77 {offsets = [32, 0], sizes = [32, 128], strides = [1, 1]} : vector<64x128xf32> to vector<32x128xf32>
      %c0_62 = arith.constant 0 : index
      %c0_63 = arith.constant 0 : index
      %109 = vector.load %arg10[%c0_62, %c0_63] : memref<32x1xf32, #tpu.memory_space<vmem>>, vector<32x1xf32>
      %110 = vector.broadcast %109 : vector<32x1xf32> to vector<32x128xf32>
      %111 = arith.addf %108, %110 : vector<32x128xf32>
      %cst_64 = arith.constant 0.000000e+00 : f32
      %112 = vector.broadcast %cst_64 : f32 to vector<32x128xf32>
      %113 = arith.maximumf %111, %112 : vector<32x128xf32>
      %114 = arith.truncf %113 : vector<32x128xf32> to vector<32x128xbf16>
      %c96_65 = arith.constant 96 : index
      %c0_66 = arith.constant 0 : index
      %115 = vector.load %arg16[%c96_65, %c0_66] : memref<128x128xbf16, #tpu.memory_space<vmem>>, vector<32x128xbf16>
      tpu.vector_store %arg16[%c96_65, %c0_66], %114 {strides = array<i32>} : memref<128x128xbf16, #tpu.memory_space<vmem>>, vector<32x128xbf16>,
    } else {
    }
    %c0 = arith.constant 0 : index
    %c0_1 = arith.constant 0 : index
    %c0_2 = arith.constant 0 : index
    %3 = vector.load %arg3[%c0, %c0_1, %c0_2] : memref<1x32x256xbf16, #tpu.memory_space<vmem>>, vector<1x32x256xbf16>
    %4 = vector.shape_cast %3 : vector<1x32x256xbf16> to vector<32x256xbf16>
    %c0_3 = arith.constant 0 : index
    %c0_4 = arith.constant 0 : index
    %5 = vector.load %arg5[%c0_3, %c0_4] : memref<96x32xbf16, #tpu.memory_space<vmem>>, vector<96x32xbf16>
    %cst = arith.constant dense<0.000000e+00> : vector<96x256xf32>
    %6 = tpu.matmul %5, %4, %cst {dimension_numbers = #tpu.dot_dimension_numbers<[1], [0], [0], [1], [0, 0, 1, 1], [], []>} : vector<96x32xbf16>, vector<32x256xbf16>, vector<96x256xf32> -> vector<96x256xf32>
    %7 = vector.extract_strided_slice %6 {offsets = [0, 0], sizes = [32, 256], strides = [1, 1]} : vector<96x256xf32> to vector<32x256xf32>
    %8 = arith.mulf %7, %7 : vector<32x256xf32>
    %cst_5 = arith.constant dense<0.000000e+00> : vector<256xf32>
    %9 = vector.multi_reduction <add>, %8, %cst_5 [0] : vector<32x256xf32> to vector<256xf32>
    %10 = vector.shape_cast %9 : vector<256xf32> to vector<1x256xf32>
    %cst_6 = arith.constant 1.000000e-24 : f32
    %11 = vector.broadcast %cst_6 : f32 to vector<1x256xf32>
    %12 = arith.maximumf %10, %11 : vector<1x256xf32>
    %13 = math.rsqrt %12 : vector<1x256xf32>
    %14 = vector.broadcast %13 : vector<1x256xf32> to vector<32x256xf32>
    %15 = arith.mulf %7, %14 : vector<32x256xf32>
    %16 = arith.truncf %15 : vector<32x256xf32> to vector<32x256xbf16>
    %17 = vector.extract_strided_slice %6 {offsets = [32, 0], sizes = [32, 256], strides = [1, 1]} : vector<96x256xf32> to vector<32x256xf32>
    %18 = arith.mulf %17, %17 : vector<32x256xf32>
    %cst_7 = arith.constant dense<0.000000e+00> : vector<256xf32>
    %19 = vector.multi_reduction <add>, %18, %cst_7 [0] : vector<32x256xf32> to vector<256xf32>
    %20 = vector.shape_cast %19 : vector<256xf32> to vector<1x256xf32>
    %cst_8 = arith.constant 1.000000e-24 : f32
    %21 = vector.broadcast %cst_8 : f32 to vector<1x256xf32>
    %22 = arith.maximumf %20, %21 : vector<1x256xf32>
    %23 = math.rsqrt %22 : vector<1x256xf32>
    %24 = vector.broadcast %23 : vector<1x256xf32> to vector<32x256xf32>
    %25 = arith.mulf %17, %24 : vector<32x256xf32>
    %26 = arith.truncf %25 : vector<32x256xf32> to vector<32x256xbf16>
    %27 = vector.extract_strided_slice %6 {offsets = [64, 0], sizes = [32, 256], strides = [1, 1]} : vector<96x256xf32> to vector<32x256xf32>
    %c0_9 = arith.constant 0 : index
    %c0_10 = arith.constant 0 : index
    %28 = vector.load %arg8[%c0_9, %c0_10] : memref<32x1xf32, #tpu.memory_space<vmem>>, vector<32x1xf32>
    %29 = vector.broadcast %28 : vector<32x1xf32> to vector<32x256xf32>
    %30 = arith.addf %27, %29 : vector<32x256xf32>
    %cst_11 = arith.constant 0.000000e+00 : f32
    %31 = vector.broadcast %cst_11 : f32 to vector<32x256xf32>
    %32 = arith.maximumf %30, %31 : vector<32x256xf32>
    %33 = arith.truncf %32 : vector<32x256xf32> to vector<32x256xbf16>
    %c0_12 = arith.constant 0 : index
    %c0_13 = arith.constant 0 : index
    %34 = vector.load %arg16[%c0_12, %c0_13] : memref<128x128xbf16, #tpu.memory_space<vmem>>, vector<32x128xbf16>
    %c32 = arith.constant 32 : index
    %c0_14 = arith.constant 0 : index
    %35 = vector.load %arg16[%c32, %c0_14] : memref<128x128xbf16, #tpu.memory_space<vmem>>, vector<32x128xbf16>
    %cst_15 = arith.constant dense<0.000000e+00> : vector<128x256xf32>
    %36 = tpu.matmul %34, %16, %cst_15 {dimension_numbers = #tpu.dot_dimension_numbers<[0], [0], [1], [1], [0, 1, 1, 1], [], []>} : vector<32x128xbf16>, vector<32x256xbf16>, vector<128x256xf32> -> vector<128x256xf32>
    %37 = arith.truncf %36 : vector<128x256xf32> to vector<128x256xbf16>
    %cst_16 = arith.constant dense<0.000000e+00> : vector<32x256xf32>
    %38 = tpu.matmul %35, %37, %cst_16 {dimension_numbers = #tpu.dot_dimension_numbers<[1], [0], [0], [1], [0, 0, 1, 1], [], []>} : vector<32x128xbf16>, vector<128x256xbf16>, vector<32x256xf32> -> vector<32x256xf32>
    %c0_17 = arith.constant 0 : index
    %c0_18 = arith.constant 0 : index
    %39 = vector.load %arg11[%c0_17, %c0_18] : memref<32x32xbf16, #tpu.memory_space<vmem>>, vector<32x32xbf16>
    %40 = arith.truncf %38 : vector<32x256xf32> to vector<32x256xbf16>
    %cst_19 = arith.constant dense<0.000000e+00> : vector<32x256xf32>
    %41 = tpu.matmul %39, %40, %cst_19 {dimension_numbers = #tpu.dot_dimension_numbers<[1], [0], [0], [1], [0, 0, 1, 1], [], []>} : vector<32x32xbf16>, vector<32x256xbf16>, vector<32x256xf32> -> vector<32x256xf32>
    %c64 = arith.constant 64 : index
    %c0_20 = arith.constant 0 : index
    %42 = vector.load %arg16[%c64, %c0_20] : memref<128x128xbf16, #tpu.memory_space<vmem>>, vector<32x128xbf16>
    %c96 = arith.constant 96 : index
    %c0_21 = arith.constant 0 : index
    %43 = vector.load %arg16[%c96, %c0_21] : memref<128x128xbf16, #tpu.memory_space<vmem>>, vector<32x128xbf16>
    %cst_22 = arith.constant dense<0.000000e+00> : vector<128x256xf32>
    %44 = tpu.matmul %42, %26, %cst_22 {dimension_numbers = #tpu.dot_dimension_numbers<[0], [0], [1], [1], [0, 1, 1, 1], [], []>} : vector<32x128xbf16>, vector<32x256xbf16>, vector<128x256xf32> -> vector<128x256xf32>
    %45 = arith.truncf %44 : vector<128x256xf32> to vector<128x256xbf16>
    %cst_23 = arith.constant dense<0.000000e+00> : vector<32x256xf32>
    %46 = tpu.matmul %43, %45, %cst_23 {dimension_numbers = #tpu.dot_dimension_numbers<[1], [0], [0], [1], [0, 0, 1, 1], [], []>} : vector<32x128xbf16>, vector<128x256xbf16>, vector<32x256xf32> -> vector<32x256xf32>
    %c0_24 = arith.constant 0 : index
    %c0_25 = arith.constant 0 : index
    %47 = vector.load %arg12[%c0_24, %c0_25] : memref<32x32xbf16, #tpu.memory_space<vmem>>, vector<32x32xbf16>
    %48 = arith.truncf %46 : vector<32x256xf32> to vector<32x256xbf16>
    %cst_26 = arith.constant dense<0.000000e+00> : vector<32x256xf32>
    %49 = tpu.matmul %47, %48, %cst_26 {dimension_numbers = #tpu.dot_dimension_numbers<[1], [0], [0], [1], [0, 0, 1, 1], [], []>} : vector<32x32xbf16>, vector<32x256xbf16>, vector<32x256xf32> -> vector<32x256xf32>
    %50 = arith.addf %41, %49 : vector<32x256xf32>
    %c0_27 = arith.constant 0 : index
    %c0_28 = arith.constant 0 : index
    %51 = vector.load %arg13[%c0_27, %c0_28] : memref<32x32xbf16, #tpu.memory_space<vmem>>, vector<32x32xbf16>
    %cst_29 = arith.constant dense<0.000000e+00> : vector<32x256xf32>
    %52 = tpu.matmul %51, %33, %cst_29 {dimension_numbers = #tpu.dot_dimension_numbers<[1], [0], [0], [1], [0, 0, 1, 1], [], []>} : vector<32x32xbf16>, vector<32x256xbf16>, vector<32x256xf32> -> vector<32x256xf32>
    %53 = arith.addf %50, %52 : vector<32x256xf32>
    %c0_30 = arith.constant 0 : index
    %c0_31 = arith.constant 0 : index
    %54 = vector.load %arg14[%c0_30, %c0_31] : memref<32x1xf32, #tpu.memory_space<vmem>>, vector<32x1xf32>
    %55 = vector.broadcast %54 : vector<32x1xf32> to vector<32x256xf32>
    %56 = arith.addf %53, %55 : vector<32x256xf32>
    %cst_32 = arith.constant 0.000000e+00 : f32
    %57 = vector.broadcast %cst_32 : f32 to vector<32x256xf32>
    %58 = arith.maximumf %56, %57 : vector<32x256xf32>
    %c0_33 = arith.constant 0 : index
    %c0_34 = arith.constant 0 : index
    %c0_35 = arith.constant 0 : index
    %59 = vector.load %arg15[%c0_33, %c0_34, %c0_35] : memref<1x32x256xf32, #tpu.memory_space<vmem>>, vector<1x32x256xf32>
    %60 = vector.shape_cast %59 : vector<1x32x256xf32> to vector<32x256xf32>
    %61 = vector.shape_cast %58 : vector<32x256xf32> to vector<1x32x256xf32>
    tpu.vector_store %arg15[%c0_33, %c0_34, %c0_35], %61 {strides = array<i32>} : memref<1x32x256xf32, #tpu.memory_space<vmem>>, vector<1x32x256xf32>,
    return
  }
  func.func @transform_0(%arg0: i32, %arg1: i32) -> (i32, i32, i32) {
    %c0_i32 = arith.constant 0 : i32
    %c0_i32_0 = arith.constant 0 : i32
    %c0_i32_1 = arith.constant 0 : i32
    return %arg0, %c0_i32, %c0_i32_0 : i32, i32, i32
  }
  func.func @transform_1(%arg0: i32, %arg1: i32) -> (i32, i32, i32) {
    %c0_i32 = arith.constant 0 : i32
    %c0_i32_0 = arith.constant 0 : i32
    return %arg0, %c0_i32, %arg1 : i32, i32, i32
  }
  func.func @transform_2(%arg0: i32, %arg1: i32) -> (i32, i32, i32) {
    %c0_i32 = arith.constant 0 : i32
    %c0_i32_0 = arith.constant 0 : i32
    %c0_i32_1 = arith.constant 0 : i32
    return %arg0, %c0_i32, %c0_i32_0 : i32, i32, i32
  }
  func.func @transform_3(%arg0: i32, %arg1: i32) -> (i32, i32) {
    %c0_i32 = arith.constant 0 : i32
    %c0_i32_0 = arith.constant 0 : i32
    %c0_i32_1 = arith.constant 0 : i32
    return %c0_i32, %c0_i32_0 : i32, i32
  }
  func.func @transform_4(%arg0: i32, %arg1: i32) -> (i32, i32) {
    %c0_i32 = arith.constant 0 : i32
    %c0_i32_0 = arith.constant 0 : i32
    %c0_i32_1 = arith.constant 0 : i32
    return %c0_i32, %c0_i32_0 : i32, i32
  }
  func.func @transform_5(%arg0: i32, %arg1: i32) -> (i32, i32) {
    %c0_i32 = arith.constant 0 : i32
    %c0_i32_0 = arith.constant 0 : i32
    %c0_i32_1 = arith.constant 0 : i32
    return %c0_i32, %c0_i32_0 : i32, i32
  }
  func.func @transform_6(%arg0: i32, %arg1: i32) -> (i32, i32) {
    %c0_i32 = arith.constant 0 : i32
    %c0_i32_0 = arith.constant 0 : i32
    %c0_i32_1 = arith.constant 0 : i32
    return %c0_i32, %c0_i32_0 : i32, i32
  }
  func.func @transform_7(%arg0: i32, %arg1: i32) -> (i32, i32) {
    %c0_i32 = arith.constant 0 : i32
    %c0_i32_0 = arith.constant 0 : i32
    %c0_i32_1 = arith.constant 0 : i32
    return %c0_i32, %c0_i32_0 : i32, i32
  }
  func.func @transform_8(%arg0: i32, %arg1: i32) -> (i32, i32) {
    %c0_i32 = arith.constant 0 : i32
    %c0_i32_0 = arith.constant 0 : i32
    %c0_i32_1 = arith.constant 0 : i32
    return %c0_i32, %c0_i32_0 : i32, i32
  }
  func.func @transform_9(%arg0: i32, %arg1: i32) -> (i32, i32) {
    %c0_i32 = arith.constant 0 : i32
    %c0_i32_0 = arith.constant 0 : i32
    %c0_i32_1 = arith.constant 0 : i32
    return %c0_i32, %c0_i32_0 : i32, i32
  }
  func.func @transform_10(%arg0: i32, %arg1: i32) -> (i32, i32) {
    %c0_i32 = arith.constant 0 : i32
    %c0_i32_0 = arith.constant 0 : i32
    %c0_i32_1 = arith.constant 0 : i32
    return %c0_i32, %c0_i32_0 : i32, i32
  }
  func.func @transform_11(%arg0: i32, %arg1: i32) -> (i32, i32) {
    %c0_i32 = arith.constant 0 : i32
    %c0_i32_0 = arith.constant 0 : i32
    %c0_i32_1 = arith.constant 0 : i32
    return %c0_i32, %c0_i32_0 : i32, i32
  }
  func.func @transform_12(%arg0: i32, %arg1: i32) -> (i32, i32) {
    %c0_i32 = arith.constant 0 : i32
    %c0_i32_0 = arith.constant 0 : i32
    %c0_i32_1 = arith.constant 0 : i32
    return %c0_i32, %c0_i32_0 : i32, i32
  }
  func.func @transform_13(%arg0: i32, %arg1: i32) -> (i32, i32, i32) {
    %c0_i32 = arith.constant 0 : i32
    %c0_i32_0 = arith.constant 0 : i32
    return %arg0, %c0_i32, %arg1 : i32, i32, i32
  }
}

</mosaic_0001>

<llo_original>
// kernel: tpu_custom_call.1
$region0: #{tpu_custom_call.1}
  #allocation0 [shape = 'u32[]', space=smem, size = 0x4, offset = 0x4, fixed_abs, tag = 'smem constant byte address 0x4 - core index']
  #allocation1 [shape = 'u32[72,128]{1,0:T(1,128)}', space=vmem, size = 0x9000, scoped, tag = 'internal scratch']
  #allocation2 [shape = 'bf16[128,128]{1,0:T(8,128)(2,1)}', space=vmem, size = 0x8000, scoped, tag = 'scratch operand']
  %s0 = inlined_call_operand.vmem [shape: f32[2,32,128], index: 0, kind: input, shape index: {}]
  %s1 = inlined_call_operand.vmem [shape: bf16[2,32,256], index: 1, kind: input, shape index: {}]
  %s2 = inlined_call_operand.vmem [shape: f32[2,1,128], index: 2, kind: input, shape index: {}]
  %s3 = inlined_call_operand.vmem [shape: bf16[96,32], index: 3, kind: input, shape index: {}]
  %s4 = inlined_call_operand.vmem [shape: bf16[64,32], index: 4, kind: input, shape index: {}]
  %s5 = inlined_call_operand.vmem [shape: bf16[64,32], index: 5, kind: input, shape index: {}]
  %s6 = inlined_call_operand.vmem [shape: f32[32,1], index: 6, kind: input, shape index: {}]
  %s7 = inlined_call_operand.vmem [shape: f32[32,1], index: 7, kind: input, shape index: {}]
  %s8 = inlined_call_operand.vmem [shape: f32[32,1], index: 8, kind: input, shape index: {}]
  %s9 = inlined_call_operand.vmem [shape: bf16[32,32], index: 9, kind: input, shape index: {}]
  %s10 = inlined_call_operand.vmem [shape: bf16[32,32], index: 10, kind: input, shape index: {}]
  %s11 = inlined_call_operand.vmem [shape: bf16[32,32], index: 11, kind: input, shape index: {}]
  %s12 = inlined_call_operand.vmem [shape: f32[32,1], index: 12, kind: input, shape index: {}]
  %s13 = inlined_call_operand.hbm [shape: f32[2,32,256], index: 13, kind: output, shape index: {}]
  %s14 = sld [smem:[#allocation0]]
  $region89: #{tpu_custom_call.1} parent=0
    _
  %s16 = ssub.s32 1, %s14
  %s17 = scalar_select 0, %s16, %s14
  $region1: #{tpu_custom_call.1} parent=0
    #allocation3 [shape = 'u8[65536]{0}', space=vmem, size = 0x10000, scoped, tag = 'output window, operand 0']
    #allocation4 [shape = 's32[2]{0}', space=sflag, size = 0x8, scoped, tag = 'scoped memory for tpu_custom_call.1']
    %18 = vsyncpa [#allocation4], 0
    %s19 = scalar_lea.sflag [#allocation4], 1
    %20 = vsyncpa %s19, 0
    loop: start=0, step=1, limit=4
    $region2: #{tpu_custom_call.1} parent=1 // loop_pre_header
      _
    $region3: #{tpu_custom_call.1} parent=1 // loop_header
      %s22 = sphi 0, %s26
      %p23 = scmp.ge.s32.totalorder %s22, 4
      %s29 = sphi 0, %s41
      %s30 = sphi 0, %s37
      %s31 = sphi 0, %s29
      %s32 = sphi 0, %s30
      %s33 = sphi 0, %s31
      %s34 = sphi 0, %s32
      %s44 = sphi 0, %s46
      %s47 = sphi 0, %s44
      %s48 = sphi 0, %s47
      %s64 = sphi 0, %s48
      %s72 = sphi 0, %s74
      %s75 = sphi 0, %s72
      %s76 = sphi 0, %s75
      %s92 = sphi 0, %s76
      %s98 = sphi 0, %s100
      %s101 = sphi 0, %s98
      %s102 = sphi 0, %s101
      %s118 = sphi 0, %s102
      %s122 = sphi 0, %s122
      %s124 = sphi 0, %s122
      %s125 = sphi 0, %s124
      %s139 = sphi 0, %s125
      %s143 = sphi 0, %s143
      %s145 = sphi 0, %s143
      %s146 = sphi 0, %s145
      %s160 = sphi 0, %s146
      %s164 = sphi 0, %s164
      %s166 = sphi 0, %s164
      %s167 = sphi 0, %s166
      %s181 = sphi 0, %s167
      %s185 = sphi 0, %s185
      %s187 = sphi 0, %s185
      %s188 = sphi 0, %s187
      %s202 = sphi 0, %s188
      %s206 = sphi 0, %s206
      %s208 = sphi 0, %s206
      %s209 = sphi 0, %s208
      %s223 = sphi 0, %s209
      %s227 = sphi 0, %s227
      %s229 = sphi 0, %s227
      %s230 = sphi 0, %s229
      %s244 = sphi 0, %s230
      %s248 = sphi 0, %s248
      %s250 = sphi 0, %s248
      %s251 = sphi 0, %s250
      %s265 = sphi 0, %s251
      %s269 = sphi 0, %s269
      %s271 = sphi 0, %s269
      %s272 = sphi 0, %s271
      %s286 = sphi 0, %s272
      %s290 = sphi 0, %s290
      %s292 = sphi 0, %s290
      %s293 = sphi 0, %s292
      %s307 = sphi 0, %s293
      %s311 = sphi 0, %s311
      %s313 = sphi 0, %s311
      %s314 = sphi 0, %s313
      %s328 = sphi 0, %s314
      %s336 = sphi 0, %s338
      %s339 = sphi 0, %s336
      %s340 = sphi 0, %s339
      %s356 = sphi 0, %s340
    $region4: #{tpu_custom_call.1} parent=1 // loop_header_branch
      %25 = sbr.rel (%p23) target = $region8
    $region5: #{tpu_custom_call.1} parent=1 // loop_body
      %s27 = ssub.s32 %s22, 1
      %s28 = ssub.s32 %s22, 2
      %s35 = sadd.s32 1, %s30
      %p36 = scmp.ge.s32.totalorder %s35, 1
      %s37 = scalar_select %p36, 0, %s35
      %s38 = sadd.s32 1, %s29
      %s39 = scalar_select %p36, %s38, %s29
      %p40 = scmp.ge.s32.totalorder %s39, 2
      %s41 = scalar_select %p40, 0, %s39
      %s42 = ssub.s32 %s29, %s41
      %p43 = scmp.eq.s32.totalorder %s42, 0
      %s45 = sadd.s32 %s44, 1
      %s46 = scalar_select %p43, %s44, %s45
      %p49 = pneg %p43
      %p50 = scmp.eq.s32.totalorder %s22, 1
      %p51 = por %p49, %p50
      %p52 = scmp.ne.s32.totalorder %s44, %s47
      %p53 = scmp.eq.s32.totalorder %s22, 0
      %p54 = por %p52, %p53
      %p55 = scmp.ne.s32.totalorder %s44, %s47
      %p56 = scmp.eq.s32.totalorder %s27, 1
      %p57 = por %p55, %p56
      %p58 = scmp.ne.s32.totalorder %s47, %s48
      %p59 = scmp.eq.s32.totalorder %s27, 0
      %p60 = por %p58, %p59
      %p61 = scmp.ne.s32.totalorder %s47, %s48
      %p62 = scmp.eq.s32.totalorder %s28, 1
      %p63 = por %p61, %p62
      %p65 = scmp.ne.s32.totalorder %s48, %s64
      %p66 = scmp.eq.s32.totalorder %s28, 0
      %p67 = por %p65, %p66
      %s68 = ssub.s32 %s29, %s41
      %s69 = ssub.s32 %s30, %s37
      %s70 = sor.u32 %s68, %s69
      %p71 = scmp.eq.s32.totalorder %s70, 0
      %s73 = sadd.s32 %s72, 1
      %s74 = scalar_select %p71, %s72, %s73
      %p77 = pneg %p71
      %p78 = scmp.eq.s32.totalorder %s22, 1
      %p79 = por %p77, %p78
      %p80 = scmp.ne.s32.totalorder %s72, %s75
      %p81 = scmp.eq.s32.totalorder %s22, 0
      %p82 = por %p80, %p81
      %p83 = scmp.ne.s32.totalorder %s72, %s75
      %p84 = scmp.eq.s32.totalorder %s27, 1
      %p85 = por %p83, %p84
      %p86 = scmp.ne.s32.totalorder %s75, %s76
      %p87 = scmp.eq.s32.totalorder %s27, 0
      %p88 = por %p86, %p87
      %p89 = scmp.ne.s32.totalorder %s75, %s76
      %p90 = scmp.eq.s32.totalorder %s28, 1
      %p91 = por %p89, %p90
      %p93 = scmp.ne.s32.totalorder %s76, %s92
      %p94 = scmp.eq.s32.totalorder %s28, 0
      %p95 = por %p93, %p94
      %s96 = ssub.s32 %s29, %s41
      %p97 = scmp.eq.s32.totalorder %s96, 0
      %s99 = sadd.s32 %s98, 1
      %s100 = scalar_select %p97, %s98, %s99
      %p103 = pneg %p97
      %p104 = scmp.eq.s32.totalorder %s22, 1
      %p105 = por %p103, %p104
      %p106 = scmp.ne.s32.totalorder %s98, %s101
      %p107 = scmp.eq.s32.totalorder %s22, 0
      %p108 = por %p106, %p107
      %p109 = scmp.ne.s32.totalorder %s98, %s101
      %p110 = scmp.eq.s32.totalorder %s27, 1
      %p111 = por %p109, %p110
      %p112 = scmp.ne.s32.totalorder %s101, %s102
      %p113 = scmp.eq.s32.totalorder %s27, 0
      %p114 = por %p112, %p113
      %p115 = scmp.ne.s32.totalorder %s101, %s102
      %p116 = scmp.eq.s32.totalorder %s28, 1
      %p117 = por %p115, %p116
      %p119 = scmp.ne.s32.totalorder %s102, %s118
      %p120 = scmp.eq.s32.totalorder %s28, 0
      %p121 = por %p119, %p120
      %s123 = sadd.s32 %s122, 1
      %p126 = scmp.eq.s32.totalorder %s22, 1
      %p127 = scmp.ne.s32.totalorder %s122, %s124
      %p128 = scmp.eq.s32.totalorder %s22, 0
      %p129 = por %p127, %p128
      %p130 = scmp.ne.s32.totalorder %s122, %s124
      %p131 = scmp.eq.s32.totalorder %s27, 1
      %p132 = por %p130, %p131
      %p133 = scmp.ne.s32.totalorder %s124, %s125
      %p134 = scmp.eq.s32.totalorder %s27, 0
      %p135 = por %p133, %p134
      %p136 = scmp.ne.s32.totalorder %s124, %s125
      %p137 = scmp.eq.s32.totalorder %s28, 1
      %p138 = por %p136, %p137
      %p140 = scmp.ne.s32.totalorder %s125, %s139
      %p141 = scmp.eq.s32.totalorder %s28, 0
      %p142 = por %p140, %p141
      %s144 = sadd.s32 %s143, 1
      %p147 = scmp.eq.s32.totalorder %s22, 1
      %p148 = scmp.ne.s32.totalorder %s143, %s145
      %p149 = scmp.eq.s32.totalorder %s22, 0
      %p150 = por %p148, %p149
      %p151 = scmp.ne.s32.totalorder %s143, %s145
      %p152 = scmp.eq.s32.totalorder %s27, 1
      %p153 = por %p151, %p152
      %p154 = scmp.ne.s32.totalorder %s145, %s146
      %p155 = scmp.eq.s32.totalorder %s27, 0
      %p156 = por %p154, %p155
      %p157 = scmp.ne.s32.totalorder %s145, %s146
      %p158 = scmp.eq.s32.totalorder %s28, 1
      %p159 = por %p157, %p158
      %p161 = scmp.ne.s32.totalorder %s146, %s160
      %p162 = scmp.eq.s32.totalorder %s28, 0
      %p163 = por %p161, %p162
      %s165 = sadd.s32 %s164, 1
      %p168 = scmp.eq.s32.totalorder %s22, 1
      %p169 = scmp.ne.s32.totalorder %s164, %s166
      %p170 = scmp.eq.s32.totalorder %s22, 0
      %p171 = por %p169, %p170
      %p172 = scmp.ne.s32.totalorder %s164, %s166
      %p173 = scmp.eq.s32.totalorder %s27, 1
      %p174 = por %p172, %p173
      %p175 = scmp.ne.s32.totalorder %s166, %s167
      %p176 = scmp.eq.s32.totalorder %s27, 0
      %p177 = por %p175, %p176
      %p178 = scmp.ne.s32.totalorder %s166, %s167
      %p179 = scmp.eq.s32.totalorder %s28, 1
      %p180 = por %p178, %p179
      %p182 = scmp.ne.s32.totalorder %s167, %s181
      %p183 = scmp.eq.s32.totalorder %s28, 0
      %p184 = por %p182, %p183
      %s186 = sadd.s32 %s185, 1
      %p189 = scmp.eq.s32.totalorder %s22, 1
      %p190 = scmp.ne.s32.totalorder %s185, %s187
      %p191 = scmp.eq.s32.totalorder %s22, 0
      %p192 = por %p190, %p191
      %p193 = scmp.ne.s32.totalorder %s185, %s187
      %p194 = scmp.eq.s32.totalorder %s27, 1
      %p195 = por %p193, %p194
      %p196 = scmp.ne.s32.totalorder %s187, %s188
      %p197 = scmp.eq.s32.totalorder %s27, 0
      %p198 = por %p196, %p197
      %p199 = scmp.ne.s32.totalorder %s187, %s188
      %p200 = scmp.eq.s32.totalorder %s28, 1
      %p201 = por %p199, %p200
      %p203 = scmp.ne.s32.totalorder %s188, %s202
      %p204 = scmp.eq.s32.totalorder %s28, 0
      %p205 = por %p203, %p204
      %s207 = sadd.s32 %s206, 1
      %p210 = scmp.eq.s32.totalorder %s22, 1
      %p211 = scmp.ne.s32.totalorder %s206, %s208
      %p212 = scmp.eq.s32.totalorder %s22, 0
      %p213 = por %p211, %p212
      %p214 = scmp.ne.s32.totalorder %s206, %s208
      %p215 = scmp.eq.s32.totalorder %s27, 1
      %p216 = por %p214, %p215
      %p217 = scmp.ne.s32.totalorder %s208, %s209
      %p218 = scmp.eq.s32.totalorder %s27, 0
      %p219 = por %p217, %p218
      %p220 = scmp.ne.s32.totalorder %s208, %s209
      %p221 = scmp.eq.s32.totalorder %s28, 1
      %p222 = por %p220, %p221
      %p224 = scmp.ne.s32.totalorder %s209, %s223
      %p225 = scmp.eq.s32.totalorder %s28, 0
      %p226 = por %p224, %p225
      %s228 = sadd.s32 %s227, 1
      %p231 = scmp.eq.s32.totalorder %s22, 1
      %p232 = scmp.ne.s32.totalorder %s227, %s229
      %p233 = scmp.eq.s32.totalorder %s22, 0
      %p234 = por %p232, %p233
      %p235 = scmp.ne.s32.totalorder %s227, %s229
      %p236 = scmp.eq.s32.totalorder %s27, 1
      %p237 = por %p235, %p236
      %p238 = scmp.ne.s32.totalorder %s229, %s230
      %p239 = scmp.eq.s32.totalorder %s27, 0
      %p240 = por %p238, %p239
      %p241 = scmp.ne.s32.totalorder %s229, %s230
      %p242 = scmp.eq.s32.totalorder %s28, 1
      %p243 = por %p241, %p242
      %p245 = scmp.ne.s32.totalorder %s230, %s244
      %p246 = scmp.eq.s32.totalorder %s28, 0
      %p247 = por %p245, %p246
      %s249 = sadd.s32 %s248, 1
      %p252 = scmp.eq.s32.totalorder %s22, 1
      %p253 = scmp.ne.s32.totalorder %s248, %s250
      %p254 = scmp.eq.s32.totalorder %s22, 0
      %p255 = por %p253, %p254
      %p256 = scmp.ne.s32.totalorder %s248, %s250
      %p257 = scmp.eq.s32.totalorder %s27, 1
      %p258 = por %p256, %p257
      %p259 = scmp.ne.s32.totalorder %s250, %s251
      %p260 = scmp.eq.s32.totalorder %s27, 0
      %p261 = por %p259, %p260
      %p262 = scmp.ne.s32.totalorder %s250, %s251
      %p263 = scmp.eq.s32.totalorder %s28, 1
      %p264 = por %p262, %p263
      %p266 = scmp.ne.s32.totalorder %s251, %s265
      %p267 = scmp.eq.s32.totalorder %s28, 0
      %p268 = por %p266, %p267
      %s270 = sadd.s32 %s269, 1
      %p273 = scmp.eq.s32.totalorder %s22, 1
      %p274 = scmp.ne.s32.totalorder %s269, %s271
      %p275 = scmp.eq.s32.totalorder %s22, 0
      %p276 = por %p274, %p275
      %p277 = scmp.ne.s32.totalorder %s269, %s271
      %p278 = scmp.eq.s32.totalorder %s27, 1
      %p279 = por %p277, %p278
      %p280 = scmp.ne.s32.totalorder %s271, %s272
      %p281 = scmp.eq.s32.totalorder %s27, 0
      %p282 = por %p280, %p281
      %p283 = scmp.ne.s32.totalorder %s271, %s272
      %p284 = scmp.eq.s32.totalorder %s28, 1
      %p285 = por %p283, %p284
      %p287 = scmp.ne.s32.totalorder %s272, %s286
      %p288 = scmp.eq.s32.totalorder %s28, 0
      %p289 = por %p287, %p288
      %s291 = sadd.s32 %s290, 1
      %p294 = scmp.eq.s32.totalorder %s22, 1
      %p295 = scmp.ne.s32.totalorder %s290, %s292
      %p296 = scmp.eq.s32.totalorder %s22, 0
      %p297 = por %p295, %p296
      %p298 = scmp.ne.s32.totalorder %s290, %s292
      %p299 = scmp.eq.s32.totalorder %s27, 1
      %p300 = por %p298, %p299
      %p301 = scmp.ne.s32.totalorder %s292, %s293
      %p302 = scmp.eq.s32.totalorder %s27, 0
      %p303 = por %p301, %p302
      %p304 = scmp.ne.s32.totalorder %s292, %s293
      %p305 = scmp.eq.s32.totalorder %s28, 1
      %p306 = por %p304, %p305
      %p308 = scmp.ne.s32.totalorder %s293, %s307
      %p309 = scmp.eq.s32.totalorder %s28, 0
      %p310 = por %p308, %p309
      %s312 = sadd.s32 %s311, 1
      %p315 = scmp.eq.s32.totalorder %s22, 1
      %p316 = scmp.ne.s32.totalorder %s311, %s313
      %p317 = scmp.eq.s32.totalorder %s22, 0
      %p318 = por %p316, %p317
      %p319 = scmp.ne.s32.totalorder %s311, %s313
      %p320 = scmp.eq.s32.totalorder %s27, 1
      %p321 = por %p319, %p320
      %p322 = scmp.ne.s32.totalorder %s313, %s314
      %p323 = scmp.eq.s32.totalorder %s27, 0
      %p324 = por %p322, %p323
      %p325 = scmp.ne.s32.totalorder %s313, %s314
      %p326 = scmp.eq.s32.totalorder %s28, 1
      %p327 = por %p325, %p326
      %p329 = scmp.ne.s32.totalorder %s314, %s328
      %p330 = scmp.eq.s32.totalorder %s28, 0
      %p331 = por %p329, %p330
      %s332 = ssub.s32 %s29, %s41
      %s333 = ssub.s32 %s30, %s37
      %s334 = sor.u32 %s332, %s333
      %p335 = scmp.eq.s32.totalorder %s334, 0
      %s337 = sadd.s32 %s336, 1
      %s338 = scalar_select %p335, %s336, %s337
      %p341 = pneg %p335
      %p342 = scmp.eq.s32.totalorder %s22, 1
      %p343 = por %p341, %p342
      %p344 = scmp.ne.s32.totalorder %s336, %s339
      %p345 = scmp.eq.s32.totalorder %s22, 0
      %p346 = por %p344, %p345
      %p347 = scmp.ne.s32.totalorder %s336, %s339
      %p348 = scmp.eq.s32.totalorder %s27, 1
      %p349 = por %p347, %p348
      %p350 = scmp.ne.s32.totalorder %s339, %s340
      %p351 = scmp.eq.s32.totalorder %s27, 0
      %p352 = por %p350, %p351
      %p353 = scmp.ne.s32.totalorder %s339, %s340
      %p354 = scmp.eq.s32.totalorder %s28, 1
      %p355 = por %p353, %p354
      %p357 = scmp.ne.s32.totalorder %s340, %s356
      %p358 = scmp.eq.s32.totalorder %s28, 0
      %p359 = por %p357, %p358
      %p360 = scmp.le.s32.totalorder 1, %s22
      %p361 = scmp.lt.s32.totalorder %s22, 3
      %p362 = pnand %p360, %p361
      %p363 = pneg %p362
      // Predicated region
      $region9: #{tpu_custom_call.1} parent=5 // pred_check
        _
      $region10: #{tpu_custom_call.1} parent=5 // pred_check_branch
        %365 = sbr.rel (%p362) target = $region12
      $region11: #{tpu_custom_call.1} parent=5 // pred_region
        %s366 = ssub.s32 %s22, 1
        // Predicated region
        $region13: #{tpu_custom_call.1} parent=11 // pred_check
          %p367 = pneg %p135
        $region14: #{tpu_custom_call.1} parent=11 // pred_check_branch
          %369 = sbr.rel (%p367) target = $region16
        $region15: #{tpu_custom_call.1} parent=11 // pred_region
          _
        $region16: #{tpu_custom_call.1} parent=11 // pred_fallthru
          _
        // Predicated region
        $region17: #{tpu_custom_call.1} parent=11 // pred_check
          %p370 = pneg %p156
        $region18: #{tpu_custom_call.1} parent=11 // pred_check_branch
          %372 = sbr.rel (%p370) target = $region20
        $region19: #{tpu_custom_call.1} parent=11 // pred_region
          _
        $region20: #{tpu_custom_call.1} parent=11 // pred_fallthru
          _
        // Predicated region
        $region21: #{tpu_custom_call.1} parent=11 // pred_check
          %p373 = pneg %p177
        $region22: #{tpu_custom_call.1} parent=11 // pred_check_branch
          %375 = sbr.rel (%p373) target = $region24
        $region23: #{tpu_custom_call.1} parent=11 // pred_region
          _
        $region24: #{tpu_custom_call.1} parent=11 // pred_fallthru
          _
        // Predicated region
        $region25: #{tpu_custom_call.1} parent=11 // pred_check
          %p376 = pneg %p198
        $region26: #{tpu_custom_call.1} parent=11 // pred_check_branch
          %378 = sbr.rel (%p376) target = $region28
        $region27: #{tpu_custom_call.1} parent=11 // pred_region
          _
        $region28: #{tpu_custom_call.1} parent=11 // pred_fallthru
          _
        // Predicated region
        $region29: #{tpu_custom_call.1} parent=11 // pred_check
          %p379 = pneg %p219
        $region30: #{tpu_custom_call.1} parent=11 // pred_check_branch
          %381 = sbr.rel (%p379) target = $region32
        $region31: #{tpu_custom_call.1} parent=11 // pred_region
          _
        $region32: #{tpu_custom_call.1} parent=11 // pred_fallthru
          _
        // Predicated region
        $region33: #{tpu_custom_call.1} parent=11 // pred_check
          %p382 = pneg %p240
        $region34: #{tpu_custom_call.1} parent=11 // pred_check_branch
          %384 = sbr.rel (%p382) target = $region36
        $region35: #{tpu_custom_call.1} parent=11 // pred_region
          _
        $region36: #{tpu_custom_call.1} parent=11 // pred_fallthru
          _
        // Predicated region
        $region37: #{tpu_custom_call.1} parent=11 // pred_check
          %p385 = pneg %p261
        $region38: #{tpu_custom_call.1} parent=11 // pred_check_branch
          %387 = sbr.rel (%p385) target = $region40
        $region39: #{tpu_custom_call.1} parent=11 // pred_region
          _
        $region40: #{tpu_custom_call.1} parent=11 // pred_fallthru
          _
        // Predicated region
        $region41: #{tpu_custom_call.1} parent=11 // pred_check
          %p388 = pneg %p282
        $region42: #{tpu_custom_call.1} parent=11 // pred_check_branch
          %390 = sbr.rel (%p388) target = $region44
        $region43: #{tpu_custom_call.1} parent=11 // pred_region
          _
        $region44: #{tpu_custom_call.1} parent=11 // pred_fallthru
          _
        // Predicated region
        $region45: #{tpu_custom_call.1} parent=11 // pred_check
          %p391 = pneg %p303
        $region46: #{tpu_custom_call.1} parent=11 // pred_check_branch
          %393 = sbr.rel (%p391) target = $region48
        $region47: #{tpu_custom_call.1} parent=11 // pred_region
          _
        $region48: #{tpu_custom_call.1} parent=11 // pred_fallthru
          _
        // Predicated region
        $region49: #{tpu_custom_call.1} parent=11 // pred_check
          %p394 = pneg %p324
        $region50: #{tpu_custom_call.1} parent=11 // pred_check_branch
          %396 = sbr.rel (%p394) target = $region52
        $region51: #{tpu_custom_call.1} parent=11 // pred_region
          _
        $region52: #{tpu_custom_call.1} parent=11 // pred_fallthru
          _
      $region12: #{tpu_custom_call.1} parent=5 // pred_fallthru
        _
      %p397 = scmp.lt.s32.totalorder %s22, 2
      // Predicated region
      $region53: #{tpu_custom_call.1} parent=5 // pred_check
        %p398 = pneg %p397
      $region54: #{tpu_custom_call.1} parent=5 // pred_check_branch
        %400 = sbr.rel (%p398) target = $region56
      $region55: #{tpu_custom_call.1} parent=5 // pred_region
        // Predicated region
        $region57: #{tpu_custom_call.1} parent=55 // pred_check
          %p401 = pneg %p54
        $region58: #{tpu_custom_call.1} parent=55 // pred_check_branch
          %403 = sbr.rel (%p401) target = $region60
        $region59: #{tpu_custom_call.1} parent=55 // pred_region
          %p404 = scmp.lt.s32.totalorder %s29, 1
          %s405 = scalar_select %p404, %s29, 1
          %s406 = smul.addr %s405, 4
          %s407 = smul.addr %s406, 8
          %s408 = scalar_lea.vmem %s0, %s407
        $region60: #{tpu_custom_call.1} parent=55 // pred_fallthru
          _
        // Predicated region
        $region61: #{tpu_custom_call.1} parent=55 // pred_check
          %p409 = pneg %p82
        $region62: #{tpu_custom_call.1} parent=55 // pred_check_branch
          %411 = sbr.rel (%p409) target = $region64
        $region63: #{tpu_custom_call.1} parent=55 // pred_region
          %s412 = smul.u32 2, %s30
          %p413 = scmp.lt.s32.totalorder %s29, 1
          %s414 = scalar_select %p413, %s29, 1
          %p415 = scmp.lt.s32.totalorder %s412, 1
          %s416 = scalar_select %p415, %s412, 1
          %s417 = smul.addr %s414, 8
          %s418 = sadd.s32 %s416, %s417
          %s419 = smul.addr %s418, 4
          %s420 = scalar_lea.vmem %s1, %s419
          %s421 = smul.u32 2, %s30
        $region64: #{tpu_custom_call.1} parent=55 // pred_fallthru
          _
        // Predicated region
        $region65: #{tpu_custom_call.1} parent=55 // pred_check
          %p422 = pneg %p108
        $region66: #{tpu_custom_call.1} parent=55 // pred_check_branch
          %424 = sbr.rel (%p422) target = $region68
        $region67: #{tpu_custom_call.1} parent=55 // pred_region
          %p425 = scmp.lt.s32.totalorder %s29, 1
          %s426 = scalar_select %p425, %s29, 1
          %s427 = scalar_lea.vmem %s2, %s426
        $region68: #{tpu_custom_call.1} parent=55 // pred_fallthru
          _
      $region56: #{tpu_custom_call.1} parent=5 // pred_fallthru
        _
      %p428 = scmp.le.s32.totalorder 1, %s22
      %p429 = scmp.lt.s32.totalorder %s22, 3
      %p430 = pnand %p428, %p429
      %p431 = pneg %p430
      // Predicated region
      $region69: #{tpu_custom_call.1} parent=5 // pred_check
        _
      $region70: #{tpu_custom_call.1} parent=5 // pred_check_branch
        %433 = sbr.rel (%p430) target = $region72
      $region71: #{tpu_custom_call.1} parent=5 // pred_region
        %s434 = ssub.s32 %s22, 1
        %p435 = scmp.lt.s32.totalorder %s31, 1
        %s436 = scalar_select %p435, %s31, 1
        %s437 = smul.addr %s436, 4
        %s438 = smul.addr %s437, 8
        %s439 = scalar_lea.vmem %s0, %s438
        %p440 = pneg %p60
        %p441 = pneg %p57
        %s442 = smul.u32 2, %s32
        %p443 = scmp.lt.s32.totalorder %s31, 1
        %s444 = scalar_select %p443, %s31, 1
        %p445 = scmp.lt.s32.totalorder %s442, 1
        %s446 = scalar_select %p445, %s442, 1
        %s447 = smul.addr %s444, 8
        %s448 = sadd.s32 %s446, %s447
        %s449 = smul.addr %s448, 4
        %s450 = scalar_lea.vmem %s1, %s449
        %p451 = pneg %p88
        %p452 = pneg %p85
        %p453 = scmp.lt.s32.totalorder %s31, 1
        %s454 = scalar_select %p453, %s31, 1
        %s455 = scalar_lea.vmem %s2, %s454
        %p456 = pneg %p114
        %p457 = pneg %p111
        %p458 = pneg %p135
        %p459 = pneg %p132
        %p460 = pneg %p156
        %p461 = pneg %p153
        %p462 = pneg %p177
        %p463 = pneg %p174
        %p464 = pneg %p198
        %p465 = pneg %p195
        %p466 = pneg %p219
        %p467 = pneg %p216
        %p468 = pneg %p240
        %p469 = pneg %p237
        %p470 = pneg %p261
        %p471 = pneg %p258
        %p472 = pneg %p282
        %p473 = pneg %p279
        %p474 = pneg %p303
        %p475 = pneg %p300
        %p476 = pneg %p324
        %p477 = pneg %p321
        %p478 = pneg %p352
        %p479 = pneg %p349
        %s480 = sand.u32 %s339, 1
        %s481 = scalar_lea.sflag [#allocation4], %s480
        %s482 = sand.u32 %s339, 1
        %s483 = smul.addr %s482, 64
        %s484 = scalar_lea.vmem [#allocation3], %s483
        %p485 = scmp.lt.s32.totalorder %s31, 1
        %s486 = scalar_select %p485, %s31, 1
        %s487 = smul.addr %s486, 4
        %s488 = smul.addr %s487, 8
        %s489 = scalar_lea.vmem %s0, %s488
        %s490 = smul.u32 2, %s32
        %p491 = scmp.lt.s32.totalorder %s31, 1
        %s492 = scalar_select %p491, %s31, 1
        %p493 = scmp.lt.s32.totalorder %s490, 1
        %s494 = scalar_select %p493, %s490, 1
        %s495 = smul.addr %s492, 8
        %s496 = sadd.s32 %s494, %s495
        %s497 = smul.addr %s496, 4
        %s498 = scalar_lea.vmem %s1, %s497
        %s499 = smul.u32 2, %s32
        %p500 = scmp.lt.s32.totalorder %s31, 1
        %s501 = scalar_select %p500, %s31, 1
        %s502 = scalar_lea.vmem %s2, %s501
        %s503 = smul.u32 2, %s32
        %p505 = scmp.eq.s32.totalorder %s32, 0
        // Predicated region
        $region73: #{tpu_custom_call.1} parent=71 // pred_check
          %p506 = pneg %p505
        $region74: #{tpu_custom_call.1} parent=71 // pred_check_branch
          %508 = sbr.rel (%p506) target = $region76
        $region75: #{tpu_custom_call.1} parent=71 // pred_region
          %v509 = vld [vmem:[%s489] sm:$0xff]
          %v510 = vld [vmem:[%s489 + $0x8] sm:$0xff]
          %v511 = vld [vmem:[%s489 + $0x10] sm:$0xff]
          %v512 = vld [vmem:[%s489 + $0x18] sm:$0xff]
          %v513 = vld [vmem:[%s502] sm:$0x1]
          %v515 = vperm.slane %v513, 0
          %v517 = vmul.f32 %v509, %v515
          %v518 = vmul.f32 %v510, %v515
          %v519 = vmul.f32 %v511, %v515
          %v520 = vmul.f32 %v512, %v515
          %v521 = vpack.c.bf16 %v518, %v517
          %v522 = vpack.c.bf16 %v520, %v519
          %v523 = vsub.f32 1.0, %v513
          %v525 = vperm.slane %v523, 0
          %v527 = vmul.f32 %v509, %v525
          %v528 = vmul.f32 %v510, %v525
          %v529 = vmul.f32 %v511, %v525
          %v530 = vmul.f32 %v512, %v525
          %v531 = vpack.c.bf16 %v528, %v527
          %v532 = vpack.c.bf16 %v530, %v529
          %v533 = vld [vmem:[%s4] sm:$0xf]
          %v534 = vld [vmem:[%s4 + $0x4] sm:$0xf]
          %v535 = vld [vmem:[%s4 + $0x8] sm:$0xf]
          %v536 = vld [vmem:[%s4 + $0xc] sm:$0xf]
          %v537 = vld [vmem:[%s4 + $0x10] sm:$0xf]
          %v538 = vld [vmem:[%s4 + $0x14] sm:$0xf]
          %v539 = vld [vmem:[%s4 + $0x18] sm:$0xf]
          %v540 = vld [vmem:[%s4 + $0x1c] sm:$0xf]
          %v549 = vunpack.c.l.b16 %v533
          %v550 = vunpack.c.l.b16 %v534
          %v551 = vunpack.c.l.b16 %v535
          %v552 = vunpack.c.l.b16 %v536
          %v553 = vunpack.c.l.b16 %v537
          %v554 = vunpack.c.l.b16 %v538
          %v555 = vunpack.c.l.b16 %v539
          %v556 = vunpack.c.l.b16 %v540
          %v557 = vpack.c.b16 %v550, %v549
          %v558 = vpack.c.b16 %v552, %v551
          %v559 = vpack.c.b16 %v554, %v553
          %v560 = vpack.c.b16 %v556, %v555
          %vm561 = vcmask 261120
          %v563 = vsel %vm561, %v557, 0
          %v566 = vsel %vm561, %v558, 0
          %v569 = vsel %vm561, %v559, 0
          %v572 = vsel %vm561, %v560, 0
          %574 = vmatpush.bf16.msra.mxu0 0
          %575 = vmatpush.bf16.msra.mxu0 0
          %576 = vmatpush.bf16.msra.mxu0 0
          %577 = vmatpush.bf16.msra.mxu0 0
          %578 = vmatpush.bf16.msra.mxu0 0
          %579 = vmatpush.bf16.msra.mxu0 0
          %580 = vmatpush.bf16.msra.mxu0 %v522
          %581 = vmatpush.bf16.msra.mxu0 %v521
          %582 = vmatmul.bf16.gmra.mxu0 %v563
          %v583 = vpop.f32.mrf.mxu0
          %v584 = vadd.f32 0.0, %v583
          %v585 = vpop.f32.mrf.mxu0
          %v586 = vadd.f32 0.0, %v585
          %587 = vmatmul.bf16.gmra.mxu0 %v566
          %v588 = vpop.f32.mrf.mxu0
          %v589 = vadd.f32 0.0, %v588
          %v590 = vpop.f32.mrf.mxu0
          %v591 = vadd.f32 0.0, %v590
          %592 = vmatmul.bf16.gmra.mxu0 %v569
          %v593 = vpop.f32.mrf.mxu0
          %v594 = vadd.f32 0.0, %v593
          %v595 = vpop.f32.mrf.mxu0
          %v596 = vadd.f32 0.0, %v595
          %597 = vmatmul.bf16.gmra.mxu0 %v572
          %v598 = vpop.f32.mrf.mxu0
          %v599 = vadd.f32 0.0, %v598
          %v600 = vpop.f32.mrf.mxu0
          %v601 = vadd.f32 0.0, %v600
          %602 = vdwg.mxu0
          %v603 = vld [vmem:[%s5] sm:$0xf]
          %v604 = vld [vmem:[%s5 + $0x4] sm:$0xf]
          %v605 = vld [vmem:[%s5 + $0x8] sm:$0xf]
          %v606 = vld [vmem:[%s5 + $0xc] sm:$0xf]
          %v607 = vld [vmem:[%s5 + $0x10] sm:$0xf]
          %v608 = vld [vmem:[%s5 + $0x14] sm:$0xf]
          %v609 = vld [vmem:[%s5 + $0x18] sm:$0xf]
          %v610 = vld [vmem:[%s5 + $0x1c] sm:$0xf]
          %v619 = vunpack.c.l.b16 %v603
          %v620 = vunpack.c.l.b16 %v604
          %v621 = vunpack.c.l.b16 %v605
          %v622 = vunpack.c.l.b16 %v606
          %v623 = vunpack.c.l.b16 %v607
          %v624 = vunpack.c.l.b16 %v608
          %v625 = vunpack.c.l.b16 %v609
          %v626 = vunpack.c.l.b16 %v610
          %v627 = vpack.c.b16 %v620, %v619
          %v628 = vpack.c.b16 %v622, %v621
          %v629 = vpack.c.b16 %v624, %v623
          %v630 = vpack.c.b16 %v626, %v625
          %v632 = vsel %vm561, %v627, 0
          %v635 = vsel %vm561, %v628, 0
          %v638 = vsel %vm561, %v629, 0
          %v641 = vsel %vm561, %v630, 0
          %643 = vmatpush.bf16.msra.mxu0 0
          %644 = vmatpush.bf16.msra.mxu0 0
          %645 = vmatpush.bf16.msra.mxu0 0
          %646 = vmatpush.bf16.msra.mxu0 0
          %647 = vmatpush.bf16.msra.mxu0 0
          %648 = vmatpush.bf16.msra.mxu0 0
          %649 = vmatpush.bf16.msra.mxu0 %v532
          %650 = vmatpush.bf16.msra.mxu0 %v531
          %651 = vmatmul.bf16.gmra.mxu0 %v632
          %v652 = vpop.f32.mrf.mxu0
          %v653 = vadd.f32 0.0, %v652
          %v654 = vpop.f32.mrf.mxu0
          %v655 = vadd.f32 0.0, %v654
          %656 = vmatmul.bf16.gmra.mxu0 %v635
          %v657 = vpop.f32.mrf.mxu0
          %v658 = vadd.f32 0.0, %v657
          %v659 = vpop.f32.mrf.mxu0
          %v660 = vadd.f32 0.0, %v659
          %661 = vmatmul.bf16.gmra.mxu0 %v638
          %v662 = vpop.f32.mrf.mxu0
          %v663 = vadd.f32 0.0, %v662
          %v664 = vpop.f32.mrf.mxu0
          %v665 = vadd.f32 0.0, %v664
          %666 = vmatmul.bf16.gmra.mxu0 %v641
          %v667 = vpop.f32.mrf.mxu0
          %v668 = vadd.f32 0.0, %v667
          %v669 = vpop.f32.mrf.mxu0
          %v670 = vadd.f32 0.0, %v669
          %671 = vdwg.mxu0
          %v672 = vmul.f32 %v584, %v584
          %v673 = vmul.f32 %v586, %v586
          %v674 = vmul.f32 %v589, %v589
          %v675 = vmul.f32 %v591, %v591
          %v676 = vadd.f32 %v672, %v673
          %v677 = vadd.f32 %v676, %v674
          %v678 = vadd.f32 %v677, %v675
          %v679 = vrot.slane %v678, 4
          %v680 = vadd.f32 %v678, %v679
          %v681 = vrot.slane %v680, 2
          %v682 = vadd.f32 %v680, %v681
          %v683 = vrot.slane %v682, 1
          %v684 = vadd.f32 %v682, %v683
          %v685 = vmax.f32 %v684, 1e-24
          %v686 = vrsqrt.pop %v685
          %v687 = vmul.f32 %v686, %v685
          %v688 = vmul.f32 %v687, %v686
          %v689 = vmul.f32 0.5, %v688
          %v690 = vsub.f32 1.5, %v689
          %v691 = vmul.f32 %v686, %v690
          %vm692 = vweird.f32 %v685
          %vm693 = vweird.f32 %v686
          %vm694 = vmor %vm692, %vm693
          %v695 = vsel %vm694, %v686, %v691
          %v696 = vmul.f32 %v584, %v695
          %v697 = vmul.f32 %v586, %v695
          %v698 = vmul.f32 %v589, %v695
          %v699 = vmul.f32 %v591, %v695
          %v700 = vpack.c.bf16 %v696, %v696
          %v701 = vpack.c.bf16 %v697, %v697
          %v702 = vpack.c.bf16 %v698, %v698
          %v703 = vpack.c.bf16 %v699, %v699
          %704 = vst [vmem:[#allocation2] sm:$0xf] %v700
          %705 = vst [vmem:[#allocation2 + $0x4] sm:$0xf] %v701
          %706 = vst [vmem:[#allocation2 + $0x8] sm:$0xf] %v702
          %707 = vst [vmem:[#allocation2 + $0xc] sm:$0xf] %v703
          %v708 = vld [vmem:[%s7] sm:$0xff]
          %v709 = vld [vmem:[%s7 + $0x8] sm:$0xff]
          %v710 = vld [vmem:[%s7 + $0x10] sm:$0xff]
          %v711 = vld [vmem:[%s7 + $0x18] sm:$0xff]
          %713 = vset.pattern.permute.xlu0 0
          %714 = vperm.xlu0 %713, %v708
          %v715 = vpop.permute.xlu0 %714
          %718 = vset.pattern.permute.xlu0 0
          %719 = vperm.xlu0 %718, %v709
          %v720 = vpop.permute.xlu0 %719
          %723 = vset.pattern.permute.xlu0 0
          %724 = vperm.xlu0 %723, %v710
          %v725 = vpop.permute.xlu0 %724
          %728 = vset.pattern.permute.xlu0 0
          %729 = vperm.xlu0 %728, %v711
          %v730 = vpop.permute.xlu0 %729
          %v732 = vadd.f32 %v594, %v715
          %v733 = vadd.f32 %v596, %v720
          %v734 = vadd.f32 %v599, %v725
          %v735 = vadd.f32 %v601, %v730
          %v736 = vmax.f32 %v732, 0.0
          %v737 = vmax.f32 %v733, 0.0
          %v738 = vmax.f32 %v734, 0.0
          %v739 = vmax.f32 %v735, 0.0
          %v740 = vpack.c.bf16 %v736, %v736
          %v741 = vpack.c.bf16 %v737, %v737
          %v742 = vpack.c.bf16 %v738, %v738
          %v743 = vpack.c.bf16 %v739, %v739
          %744 = vst [vmem:[#allocation2 + $0x10] sm:$0xf] %v740
          %745 = vst [vmem:[#allocation2 + $0x14] sm:$0xf] %v741
          %746 = vst [vmem:[#allocation2 + $0x18] sm:$0xf] %v742
          %747 = vst [vmem:[#allocation2 + $0x1c] sm:$0xf] %v743
          %v748 = vmul.f32 %v653, %v653
          %v749 = vmul.f32 %v655, %v655
          %v750 = vmul.f32 %v658, %v658
          %v751 = vmul.f32 %v660, %v660
          %v752 = vadd.f32 %v748, %v749
          %v753 = vadd.f32 %v752, %v750
          %v754 = vadd.f32 %v753, %v751
          %v755 = vrot.slane %v754, 4
          %v756 = vadd.f32 %v754, %v755
          %v757 = vrot.slane %v756, 2
          %v758 = vadd.f32 %v756, %v757
          %v759 = vrot.slane %v758, 1
          %v760 = vadd.f32 %v758, %v759
          %v761 = vmax.f32 %v760, 1e-24
          %v762 = vrsqrt.pop %v761
          %v763 = vmul.f32 %v762, %v761
          %v764 = vmul.f32 %v763, %v762
          %v765 = vmul.f32 0.5, %v764
          %v766 = vsub.f32 1.5, %v765
          %v767 = vmul.f32 %v762, %v766
          %vm768 = vweird.f32 %v761
          %vm769 = vweird.f32 %v762
          %vm770 = vmor %vm768, %vm769
          %v771 = vsel %vm770, %v762, %v767
          %v772 = vmul.f32 %v653, %v771
          %v773 = vmul.f32 %v655, %v771
          %v774 = vmul.f32 %v658, %v771
          %v775 = vmul.f32 %v660, %v771
          %v776 = vpack.c.bf16 %v772, %v772
          %v777 = vpack.c.bf16 %v773, %v773
          %v778 = vpack.c.bf16 %v774, %v774
          %v779 = vpack.c.bf16 %v775, %v775
          %780 = vst [vmem:[#allocation2 + $0x20] sm:$0xf] %v776
          %781 = vst [vmem:[#allocation2 + $0x24] sm:$0xf] %v777
          %782 = vst [vmem:[#allocation2 + $0x28] sm:$0xf] %v778
          %783 = vst [vmem:[#allocation2 + $0x2c] sm:$0xf] %v779
          %v784 = vld [vmem:[%s8] sm:$0xff]
          %v785 = vld [vmem:[%s8 + $0x8] sm:$0xff]
          %v786 = vld [vmem:[%s8 + $0x10] sm:$0xff]
          %v787 = vld [vmem:[%s8 + $0x18] sm:$0xff]
          %789 = vset.pattern.permute.xlu0 0
          %790 = vperm.xlu0 %789, %v784
          %v791 = vpop.permute.xlu0 %790
          %794 = vset.pattern.permute.xlu0 0
          %795 = vperm.xlu0 %794, %v785
          %v796 = vpop.permute.xlu0 %795
          %799 = vset.pattern.permute.xlu0 0
          %800 = vperm.xlu0 %799, %v786
          %v801 = vpop.permute.xlu0 %800
          %804 = vset.pattern.permute.xlu0 0
          %805 = vperm.xlu0 %804, %v787
          %v806 = vpop.permute.xlu0 %805
          %v808 = vadd.f32 %v663, %v791
          %v809 = vadd.f32 %v665, %v796
          %v810 = vadd.f32 %v668, %v801
          %v811 = vadd.f32 %v670, %v806
          %v812 = vmax.f32 %v808, 0.0
          %v813 = vmax.f32 %v809, 0.0
          %v814 = vmax.f32 %v810, 0.0
          %v815 = vmax.f32 %v811, 0.0
          %v816 = vpack.c.bf16 %v812, %v812
          %v817 = vpack.c.bf16 %v813, %v813
          %v818 = vpack.c.bf16 %v814, %v814
          %v819 = vpack.c.bf16 %v815, %v815
          %820 = vst [vmem:[#allocation2 + $0x30] sm:$0xf] %v816
          %821 = vst [vmem:[#allocation2 + $0x34] sm:$0xf] %v817
          %822 = vst [vmem:[#allocation2 + $0x38] sm:$0xf] %v818
          %823 = vst [vmem:[#allocation2 + $0x3c] sm:$0xf] %v819
        $region76: #{tpu_custom_call.1} parent=71 // pred_fallthru
          _
        %v824 = vld [vmem:[%s498] sm:$0xff]
        %v825 = vld [vmem:[%s498 + $0x8] sm:$0xff]
        %v826 = vld [vmem:[%s498 + $0x10] sm:$0xff]
        %v827 = vld [vmem:[%s498 + $0x18] sm:$0xff]
        %v828 = vld [vmem:[%s3] sm:$0xf]
        %v829 = vld [vmem:[%s3 + $0x4] sm:$0xf]
        %v830 = vld [vmem:[%s3 + $0x8] sm:$0xf]
        %v831 = vld [vmem:[%s3 + $0xc] sm:$0xf]
        %v832 = vld [vmem:[%s3 + $0x10] sm:$0xf]
        %v833 = vld [vmem:[%s3 + $0x14] sm:$0xf]
        %v834 = vld [vmem:[%s3 + $0x18] sm:$0xf]
        %v835 = vld [vmem:[%s3 + $0x1c] sm:$0xf]
        %v836 = vld [vmem:[%s3 + $0x20] sm:$0xf]
        %v837 = vld [vmem:[%s3 + $0x24] sm:$0xf]
        %v838 = vld [vmem:[%s3 + $0x28] sm:$0xf]
        %v839 = vld [vmem:[%s3 + $0x2c] sm:$0xf]
        %v852 = vunpack.c.l.b16 %v828
        %v853 = vunpack.c.l.b16 %v829
        %v854 = vunpack.c.l.b16 %v830
        %v855 = vunpack.c.l.b16 %v831
        %v856 = vunpack.c.l.b16 %v832
        %v857 = vunpack.c.l.b16 %v833
        %v858 = vunpack.c.l.b16 %v834
        %v859 = vunpack.c.l.b16 %v835
        %v860 = vunpack.c.l.b16 %v836
        %v861 = vunpack.c.l.b16 %v837
        %v862 = vunpack.c.l.b16 %v838
        %v863 = vunpack.c.l.b16 %v839
        %v864 = vpack.c.b16 %v853, %v852
        %v865 = vpack.c.b16 %v855, %v854
        %v866 = vpack.c.b16 %v857, %v856
        %v867 = vpack.c.b16 %v859, %v858
        %v868 = vpack.c.b16 %v861, %v860
        %v869 = vpack.c.b16 %v863, %v862
        %v874 = vunpack.c.l.b16 %v824
        %v875 = vunpack.c.h.b16 %v824
        %v876 = vunpack.c.l.b16 %v825
        %v877 = vunpack.c.h.b16 %v825
        %v878 = vunpack.c.l.b16 %v826
        %v879 = vunpack.c.h.b16 %v826
        %v880 = vunpack.c.l.b16 %v827
        %v881 = vunpack.c.h.b16 %v827
        %v882 = vpack.c.b16 %v876, %v874
        %v883 = vpack.c.b16 %v877, %v875
        %v884 = vpack.c.b16 %v880, %v878
        %v885 = vpack.c.b16 %v881, %v879
        %vm890 = vcmask 261120
        %v892 = vsel %vm890, %v864, 0
        %v895 = vsel %vm890, %v865, 0
        %v898 = vsel %vm890, %v866, 0
        %v901 = vsel %vm890, %v867, 0
        %v904 = vsel %vm890, %v868, 0
        %v907 = vsel %vm890, %v869, 0
        %909 = vmatpush.bf16.msra.mxu0 0
        %910 = vmatpush.bf16.msra.mxu0 0
        %911 = vmatpush.bf16.msra.mxu0 0
        %912 = vmatpush.bf16.msra.mxu0 0
        %913 = vmatpush.bf16.msra.mxu0 0
        %914 = vmatpush.bf16.msra.mxu0 0
        %915 = vmatpush.bf16.msra.mxu0 %v884
        %916 = vmatpush.bf16.msra.mxu0 %v882
        %917 = vmatmul.bf16.gmra.mxu0 %v892
        %v918 = vpop.f32.mrf.mxu0
        %v919 = vadd.f32 0.0, %v918
        %v920 = vpop.f32.mrf.mxu0
        %v921 = vadd.f32 0.0, %v920
        %922 = vmatmul.bf16.gmra.mxu0 %v895
        %v923 = vpop.f32.mrf.mxu0
        %v924 = vadd.f32 0.0, %v923
        %v925 = vpop.f32.mrf.mxu0
        %v926 = vadd.f32 0.0, %v925
        %927 = vmatmul.bf16.gmra.mxu0 %v898
        %v928 = vpop.f32.mrf.mxu0
        %v929 = vadd.f32 0.0, %v928
        %v930 = vpop.f32.mrf.mxu0
        %v931 = vadd.f32 0.0, %v930
        %932 = vmatmul.bf16.gmra.mxu0 %v901
        %v933 = vpop.f32.mrf.mxu0
        %v934 = vadd.f32 0.0, %v933
        %v935 = vpop.f32.mrf.mxu0
        %v936 = vadd.f32 0.0, %v935
        %937 = vmatmul.bf16.gmra.mxu0 %v904
        %v938 = vpop.f32.mrf.mxu0
        %v939 = vadd.f32 0.0, %v938
        %v940 = vpop.f32.mrf.mxu0
        %v941 = vadd.f32 0.0, %v940
        %942 = vmatmul.bf16.gmra.mxu0 %v907
        %v943 = vpop.f32.mrf.mxu0
        %v944 = vadd.f32 0.0, %v943
        %v945 = vpop.f32.mrf.mxu0
        %v946 = vadd.f32 0.0, %v945
        %947 = vdwg.mxu0
        %948 = vmatpush.bf16.msra.mxu0 0
        %949 = vmatpush.bf16.msra.mxu0 0
        %950 = vmatpush.bf16.msra.mxu0 0
        %951 = vmatpush.bf16.msra.mxu0 0
        %952 = vmatpush.bf16.msra.mxu0 0
        %953 = vmatpush.bf16.msra.mxu0 0
        %954 = vmatpush.bf16.msra.mxu0 %v885
        %955 = vmatpush.bf16.msra.mxu0 %v883
        %956 = vmatmul.bf16.gmra.mxu0 %v892
        %v957 = vpop.f32.mrf.mxu0
        %v958 = vadd.f32 0.0, %v957
        %v959 = vpop.f32.mrf.mxu0
        %v960 = vadd.f32 0.0, %v959
        %961 = vmatmul.bf16.gmra.mxu0 %v895
        %v962 = vpop.f32.mrf.mxu0
        %v963 = vadd.f32 0.0, %v962
        %v964 = vpop.f32.mrf.mxu0
        %v965 = vadd.f32 0.0, %v964
        %966 = vmatmul.bf16.gmra.mxu0 %v898
        %v967 = vpop.f32.mrf.mxu0
        %v968 = vadd.f32 0.0, %v967
        %v969 = vpop.f32.mrf.mxu0
        %v970 = vadd.f32 0.0, %v969
        %971 = vmatmul.bf16.gmra.mxu0 %v901
        %v972 = vpop.f32.mrf.mxu0
        %v973 = vadd.f32 0.0, %v972
        %v974 = vpop.f32.mrf.mxu0
        %v975 = vadd.f32 0.0, %v974
        %976 = vmatmul.bf16.gmra.mxu0 %v904
        %v977 = vpop.f32.mrf.mxu0
        %v978 = vadd.f32 0.0, %v977
        %v979 = vpop.f32.mrf.mxu0
        %v980 = vadd.f32 0.0, %v979
        %981 = vmatmul.bf16.gmra.mxu0 %v907
        %v982 = vpop.f32.mrf.mxu0
        %v983 = vadd.f32 0.0, %v982
        %v984 = vpop.f32.mrf.mxu0
        %v985 = vadd.f32 0.0, %v984
        %986 = vdwg.mxu0
        %v987 = vmul.f32 %v919, %v919
        %v988 = vmul.f32 %v958, %v958
        %v989 = vmul.f32 %v921, %v921
        %v990 = vmul.f32 %v960, %v960
        %v991 = vmul.f32 %v924, %v924
        %v992 = vmul.f32 %v963, %v963
        %v993 = vmul.f32 %v926, %v926
        %v994 = vmul.f32 %v965, %v965
        %v995 = vadd.f32 %v987, %v989
        %v996 = vadd.f32 %v995, %v991
        %v997 = vadd.f32 %v996, %v993
        %v998 = vrot.slane %v997, 4
        %v999 = vadd.f32 %v997, %v998
        %v1000 = vrot.slane %v999, 2
        %v1001 = vadd.f32 %v999, %v1000
        %v1002 = vrot.slane %v1001, 1
        %v1003 = vadd.f32 %v1001, %v1002
        %v1004 = vadd.f32 %v988, %v990
        %v1005 = vadd.f32 %v1004, %v992
        %v1006 = vadd.f32 %v1005, %v994
        %v1007 = vrot.slane %v1006, 4
        %v1008 = vadd.f32 %v1006, %v1007
        %v1009 = vrot.slane %v1008, 2
        %v1010 = vadd.f32 %v1008, %v1009
        %v1011 = vrot.slane %v1010, 1
        %v1012 = vadd.f32 %v1010, %v1011
        %v1013 = vmax.f32 %v1003, 1e-24
        %v1014 = vmax.f32 %v1012, 1e-24
        %v1015 = vrsqrt.pop %v1013
        %v1016 = vmul.f32 %v1015, %v1013
        %v1017 = vmul.f32 %v1016, %v1015
        %v1018 = vmul.f32 0.5, %v1017
        %v1019 = vsub.f32 1.5, %v1018
        %v1020 = vmul.f32 %v1015, %v1019
        %vm1021 = vweird.f32 %v1013
        %vm1022 = vweird.f32 %v1015
        %vm1023 = vmor %vm1021, %vm1022
        %v1024 = vsel %vm1023, %v1015, %v1020
        %v1025 = vrsqrt.pop %v1014
        %v1026 = vmul.f32 %v1025, %v1014
        %v1027 = vmul.f32 %v1026, %v1025
        %v1028 = vmul.f32 0.5, %v1027
        %v1029 = vsub.f32 1.5, %v1028
        %v1030 = vmul.f32 %v1025, %v1029
        %vm1031 = vweird.f32 %v1014
        %vm1032 = vweird.f32 %v1025
        %vm1033 = vmor %vm1031, %vm1032
        %v1034 = vsel %vm1033, %v1025, %v1030
        %v1035 = vmul.f32 %v919, %v1024
        %v1036 = vmul.f32 %v958, %v1034
        %v1037 = vmul.f32 %v921, %v1024
        %v1038 = vmul.f32 %v960, %v1034
        %v1039 = vmul.f32 %v924, %v1024
        %v1040 = vmul.f32 %v963, %v1034
        %v1041 = vmul.f32 %v926, %v1024
        %v1042 = vmul.f32 %v965, %v1034
        %v1043 = vpack.c.bf16 %v1037, %v1035
        %v1044 = vpack.c.bf16 %v1038, %v1036
        %v1045 = vpack.c.bf16 %v1041, %v1039
        %v1046 = vpack.c.bf16 %v1042, %v1040
        %v1047 = vmul.f32 %v929, %v929
        %v1048 = vmul.f32 %v968, %v968
        %v1049 = vmul.f32 %v931, %v931
        %v1050 = vmul.f32 %v970, %v970
        %v1051 = vmul.f32 %v934, %v934
        %v1052 = vmul.f32 %v973, %v973
        %v1053 = vmul.f32 %v936, %v936
        %v1054 = vmul.f32 %v975, %v975
        %v1055 = vadd.f32 %v1047, %v1049
        %v1056 = vadd.f32 %v1055, %v1051
        %v1057 = vadd.f32 %v1056, %v1053
        %v1058 = vrot.slane %v1057, 4
        %v1059 = vadd.f32 %v1057, %v1058
        %v1060 = vrot.slane %v1059, 2
        %v1061 = vadd.f32 %v1059, %v1060
        %v1062 = vrot.slane %v1061, 1
        %v1063 = vadd.f32 %v1061, %v1062
        %v1064 = vadd.f32 %v1048, %v1050
        %v1065 = vadd.f32 %v1064, %v1052
        %v1066 = vadd.f32 %v1065, %v1054
        %v1067 = vrot.slane %v1066, 4
        %v1068 = vadd.f32 %v1066, %v1067
        %v1069 = vrot.slane %v1068, 2
        %v1070 = vadd.f32 %v1068, %v1069
        %v1071 = vrot.slane %v1070, 1
        %v1072 = vadd.f32 %v1070, %v1071
        %v1073 = vmax.f32 %v1063, 1e-24
        %v1074 = vmax.f32 %v1072, 1e-24
        %v1075 = vrsqrt.pop %v1073
        %v1076 = vmul.f32 %v1075, %v1073
        %v1077 = vmul.f32 %v1076, %v1075
        %v1078 = vmul.f32 0.5, %v1077
        %v1079 = vsub.f32 1.5, %v1078
        %v1080 = vmul.f32 %v1075, %v1079
        %vm1081 = vweird.f32 %v1073
        %vm1082 = vweird.f32 %v1075
        %vm1083 = vmor %vm1081, %vm1082
        %v1084 = vsel %vm1083, %v1075, %v1080
        %v1085 = vrsqrt.pop %v1074
        %v1086 = vmul.f32 %v1085, %v1074
        %v1087 = vmul.f32 %v1086, %v1085
        %v1088 = vmul.f32 0.5, %v1087
        %v1089 = vsub.f32 1.5, %v1088
        %v1090 = vmul.f32 %v1085, %v1089
        %vm1091 = vweird.f32 %v1074
        %vm1092 = vweird.f32 %v1085
        %vm1093 = vmor %vm1091, %vm1092
        %v1094 = vsel %vm1093, %v1085, %v1090
        %v1095 = vmul.f32 %v929, %v1084
        %v1096 = vmul.f32 %v968, %v1094
        %v1097 = vmul.f32 %v931, %v1084
        %v1098 = vmul.f32 %v970, %v1094
        %v1099 = vmul.f32 %v934, %v1084
        %v1100 = vmul.f32 %v973, %v1094
        %v1101 = vmul.f32 %v936, %v1084
        %v1102 = vmul.f32 %v975, %v1094
        %v1103 = vpack.c.bf16 %v1097, %v1095
        %v1104 = vpack.c.bf16 %v1098, %v1096
        %v1105 = vpack.c.bf16 %v1101, %v1099
        %v1106 = vpack.c.bf16 %v1102, %v1100
        %v1107 = vld [vmem:[%s6] sm:$0xff]
        %v1108 = vld [vmem:[%s6 + $0x8] sm:$0xff]
        %v1109 = vld [vmem:[%s6 + $0x10] sm:$0xff]
        %v1110 = vld [vmem:[%s6 + $0x18] sm:$0xff]
        %1112 = vset.pattern.permute.xlu0 0
        %1113 = vperm.xlu0 %1112, %v1107
        %v1114 = vpop.permute.xlu0 %1113
        %1117 = vset.pattern.permute.xlu0 0
        %1118 = vperm.xlu0 %1117, %v1108
        %v1119 = vpop.permute.xlu0 %1118
        %1122 = vset.pattern.permute.xlu0 0
        %1123 = vperm.xlu0 %1122, %v1109
        %v1124 = vpop.permute.xlu0 %1123
        %1127 = vset.pattern.permute.xlu0 0
        %1128 = vperm.xlu0 %1127, %v1110
        %v1129 = vpop.permute.xlu0 %1128
        %v1131 = vadd.f32 %v939, %v1114
        %v1132 = vadd.f32 %v978, %v1114
        %v1133 = vadd.f32 %v941, %v1119
        %v1134 = vadd.f32 %v980, %v1119
        %v1135 = vadd.f32 %v944, %v1124
        %v1136 = vadd.f32 %v983, %v1124
        %v1137 = vadd.f32 %v946, %v1129
        %v1138 = vadd.f32 %v985, %v1129
        %v1139 = vmax.f32 %v1131, 0.0
        %v1140 = vmax.f32 %v1132, 0.0
        %v1141 = vmax.f32 %v1133, 0.0
        %v1142 = vmax.f32 %v1134, 0.0
        %v1143 = vmax.f32 %v1135, 0.0
        %v1144 = vmax.f32 %v1136, 0.0
        %v1145 = vmax.f32 %v1137, 0.0
        %v1146 = vmax.f32 %v1138, 0.0
        %v1147 = vpack.c.bf16 %v1141, %v1139
        %v1148 = vpack.c.bf16 %v1142, %v1140
        %v1149 = vpack.c.bf16 %v1145, %v1143
        %v1150 = vpack.c.bf16 %v1146, %v1144
        %v1151 = vld [vmem:[#allocation2] sm:$0xf]
        %v1152 = vld [vmem:[#allocation2 + $0x4] sm:$0xf]
        %v1153 = vld [vmem:[#allocation2 + $0x8] sm:$0xf]
        %v1154 = vld [vmem:[#allocation2 + $0xc] sm:$0xf]
        %v1155 = vld [vmem:[#allocation2 + $0x10] sm:$0xf]
        %v1156 = vld [vmem:[#allocation2 + $0x14] sm:$0xf]
        %v1157 = vld [vmem:[#allocation2 + $0x18] sm:$0xf]
        %v1158 = vld [vmem:[#allocation2 + $0x1c] sm:$0xf]
        %v1163 = vunpack.c.l.b16 %v1151
        %v1164 = vunpack.c.l.b16 %v1152
        %v1165 = vunpack.c.l.b16 %v1153
        %v1166 = vunpack.c.l.b16 %v1154
        %v1167 = vpack.c.b16 %v1164, %v1163
        %v1168 = vpack.c.b16 %v1166, %v1165
        %1171 = vxpose.xlu0.c.b16.start [1/8] %v1167, 128
        %1172 = vxpose.xlu0.c.b16.cont [2/8] %v1168, 128
        %1173 = vxpose.xlu0.c.b16.cont [3/8] 0, 128
        %1174 = vxpose.xlu0.c.b16.cont [4/8] 0, 128
        %1175 = vxpose.xlu0.c.b16.cont [5/8] 0, 128
        %1176 = vxpose.xlu0.c.b16.cont [6/8] 0, 128
        %1177 = vxpose.xlu0.c.b16.cont [7/8] 0, 128
        %1178 = vxpose.xlu0.c.b16.end [8/8] 0, 128
        %v1179 = vpop.trf.xlu0
        %v1180 = vpop.trf.xlu0
        %v1181 = vpop.trf.xlu0
        %v1182 = vpop.trf.xlu0
        %v1183 = vpop.trf.xlu0
        %v1184 = vpop.trf.xlu0
        %v1185 = vpop.trf.xlu0
        %v1186 = vpop.trf.xlu0
        %v1188 = vsel %vm890, %v1179, 0
        %v1191 = vsel %vm890, %v1180, 0
        %v1194 = vsel %vm890, %v1181, 0
        %v1197 = vsel %vm890, %v1182, 0
        %v1200 = vsel %vm890, %v1183, 0
        %v1203 = vsel %vm890, %v1184, 0
        %v1206 = vsel %vm890, %v1185, 0
        %v1209 = vsel %vm890, %v1186, 0
        %1211 = vmatpush.bf16.msra.mxu0 0
        %1212 = vmatpush.bf16.msra.mxu0 0
        %1213 = vmatpush.bf16.msra.mxu0 0
        %1214 = vmatpush.bf16.msra.mxu0 0
        %1215 = vmatpush.bf16.msra.mxu0 0
        %1216 = vmatpush.bf16.msra.mxu0 0
        %1217 = vmatpush.bf16.msra.mxu0 %v1045
        %1218 = vmatpush.bf16.msra.mxu0 %v1043
        %1219 = vmatmul.bf16.gmra.mxu0 %v1188
        %v1220 = vpop.f32.mrf.mxu0
        %v1221 = vadd.f32 0.0, %v1220
        %v1222 = vpop.f32.mrf.mxu0
        %v1223 = vadd.f32 0.0, %v1222
        %1224 = vmatmul.bf16.gmra.mxu0 %v1191
        %v1225 = vpop.f32.mrf.mxu0
        %v1226 = vadd.f32 0.0, %v1225
        %v1227 = vpop.f32.mrf.mxu0
        %v1228 = vadd.f32 0.0, %v1227
        %1229 = vmatmul.bf16.gmra.mxu0 %v1194
        %v1230 = vpop.f32.mrf.mxu0
        %v1231 = vadd.f32 0.0, %v1230
        %v1232 = vpop.f32.mrf.mxu0
        %v1233 = vadd.f32 0.0, %v1232
        %1234 = vmatmul.bf16.gmra.mxu0 %v1197
        %v1235 = vpop.f32.mrf.mxu0
        %v1236 = vadd.f32 0.0, %v1235
        %v1237 = vpop.f32.mrf.mxu0
        %v1238 = vadd.f32 0.0, %v1237
        %1239 = vmatmul.bf16.gmra.mxu0 %v1200
        %v1240 = vpop.f32.mrf.mxu0
        %v1241 = vadd.f32 0.0, %v1240
        %v1242 = vpop.f32.mrf.mxu0
        %v1243 = vadd.f32 0.0, %v1242
        %1244 = vmatmul.bf16.gmra.mxu0 %v1203
        %v1245 = vpop.f32.mrf.mxu0
        %v1246 = vadd.f32 0.0, %v1245
        %v1247 = vpop.f32.mrf.mxu0
        %v1248 = vadd.f32 0.0, %v1247
        %1249 = vmatmul.bf16.gmra.mxu0 %v1206
        %v1250 = vpop.f32.mrf.mxu0
        %v1251 = vadd.f32 0.0, %v1250
        %v1252 = vpop.f32.mrf.mxu0
        %v1253 = vadd.f32 0.0, %v1252
        %1254 = vmatmul.bf16.gmra.mxu0 %v1209
        %v1255 = vpop.f32.mrf.mxu0
        %v1256 = vadd.f32 0.0, %v1255
        %v1257 = vpop.f32.mrf.mxu0
        %v1258 = vadd.f32 0.0, %v1257
        %1259 = vdwg.mxu0
        %1260 = vmatpush.bf16.msra.mxu0 0
        %1261 = vmatpush.bf16.msra.mxu0 0
        %1262 = vmatpush.bf16.msra.mxu0 0
        %1263 = vmatpush.bf16.msra.mxu0 0
        %1264 = vmatpush.bf16.msra.mxu0 0
        %1265 = vmatpush.bf16.msra.mxu0 0
        %1266 = vmatpush.bf16.msra.mxu0 %v1046
        %1267 = vmatpush.bf16.msra.mxu0 %v1044
        %1268 = vmatmul.bf16.gmra.mxu0 %v1188
        %v1269 = vpop.f32.mrf.mxu0
        %v1270 = vadd.f32 0.0, %v1269
        %v1271 = vpop.f32.mrf.mxu0
        %v1272 = vadd.f32 0.0, %v1271
        %1273 = vmatmul.bf16.gmra.mxu0 %v1191
        %v1274 = vpop.f32.mrf.mxu0
        %v1275 = vadd.f32 0.0, %v1274
        %v1276 = vpop.f32.mrf.mxu0
        %v1277 = vadd.f32 0.0, %v1276
        %1278 = vmatmul.bf16.gmra.mxu0 %v1194
        %v1279 = vpop.f32.mrf.mxu0
        %v1280 = vadd.f32 0.0, %v1279
        %v1281 = vpop.f32.mrf.mxu0
        %v1282 = vadd.f32 0.0, %v1281
        %1283 = vmatmul.bf16.gmra.mxu0 %v1197
        %v1284 = vpop.f32.mrf.mxu0
        %v1285 = vadd.f32 0.0, %v1284
        %v1286 = vpop.f32.mrf.mxu0
        %v1287 = vadd.f32 0.0, %v1286
        %1288 = vmatmul.bf16.gmra.mxu0 %v1200
        %v1289 = vpop.f32.mrf.mxu0
        %v1290 = vadd.f32 0.0, %v1289
        %v1291 = vpop.f32.mrf.mxu0
        %v1292 = vadd.f32 0.0, %v1291
        %1293 = vmatmul.bf16.gmra.mxu0 %v1203
        %v1294 = vpop.f32.mrf.mxu0
        %v1295 = vadd.f32 0.0, %v1294
        %v1296 = vpop.f32.mrf.mxu0
        %v1297 = vadd.f32 0.0, %v1296
        %1298 = vmatmul.bf16.gmra.mxu0 %v1206
        %v1299 = vpop.f32.mrf.mxu0
        %v1300 = vadd.f32 0.0, %v1299
        %v1301 = vpop.f32.mrf.mxu0
        %v1302 = vadd.f32 0.0, %v1301
        %1303 = vmatmul.bf16.gmra.mxu0 %v1209
        %v1304 = vpop.f32.mrf.mxu0
        %v1305 = vadd.f32 0.0, %v1304
        %v1306 = vpop.f32.mrf.mxu0
        %v1307 = vadd.f32 0.0, %v1306
        %1308 = vdwg.mxu0
        %v1309 = vpack.c.bf16 %v1223, %v1221
        %v1310 = vpack.c.bf16 %v1272, %v1270
        %v1311 = vpack.c.bf16 %v1228, %v1226
        %v1312 = vpack.c.bf16 %v1277, %v1275
        %v1313 = vpack.c.bf16 %v1233, %v1231
        %v1314 = vpack.c.bf16 %v1282, %v1280
        %v1315 = vpack.c.bf16 %v1238, %v1236
        %v1316 = vpack.c.bf16 %v1287, %v1285
        %v1317 = vpack.c.bf16 %v1243, %v1241
        %v1318 = vpack.c.bf16 %v1292, %v1290
        %v1319 = vpack.c.bf16 %v1248, %v1246
        %v1320 = vpack.c.bf16 %v1297, %v1295
        %v1321 = vpack.c.bf16 %v1253, %v1251
        %v1322 = vpack.c.bf16 %v1302, %v1300
        %v1323 = vpack.c.bf16 %v1258, %v1256
        %v1324 = vpack.c.bf16 %v1307, %v1305
        %v1329 = vunpack.c.l.b16 %v1155
        %v1330 = vunpack.c.l.b16 %v1156
        %v1331 = vunpack.c.l.b16 %v1157
        %v1332 = vunpack.c.l.b16 %v1158
        %v1333 = vpack.c.b16 %v1330, %v1329
        %v1334 = vpack.c.b16 %v1332, %v1331
        %1337 = vmatpush.bf16.msra.mxu0 %v1323
        %1338 = vmatpush.bf16.msra.mxu0 %v1321
        %1339 = vmatpush.bf16.msra.mxu0 %v1319
        %1340 = vmatpush.bf16.msra.mxu0 %v1317
        %1341 = vmatpush.bf16.msra.mxu0 %v1315
        %1342 = vmatpush.bf16.msra.mxu0 %v1313
        %1343 = vmatpush.bf16.msra.mxu0 %v1311
        %1344 = vmatpush.bf16.msra.mxu0 %v1309
        %1345 = vmatmul.bf16.gmra.mxu0 %v1333
        %v1346 = vpop.f32.mrf.mxu0
        %v1347 = vadd.f32 0.0, %v1346
        %v1348 = vpop.f32.mrf.mxu0
        %v1349 = vadd.f32 0.0, %v1348
        %1350 = vmatmul.bf16.gmra.mxu0 %v1334
        %v1351 = vpop.f32.mrf.mxu0
        %v1352 = vadd.f32 0.0, %v1351
        %v1353 = vpop.f32.mrf.mxu0
        %v1354 = vadd.f32 0.0, %v1353
        %1355 = vdwg.mxu0
        %1356 = vmatpush.bf16.msra.mxu0 %v1324
        %1357 = vmatpush.bf16.msra.mxu0 %v1322
        %1358 = vmatpush.bf16.msra.mxu0 %v1320
        %1359 = vmatpush.bf16.msra.mxu0 %v1318
        %1360 = vmatpush.bf16.msra.mxu0 %v1316
        %1361 = vmatpush.bf16.msra.mxu0 %v1314
        %1362 = vmatpush.bf16.msra.mxu0 %v1312
        %1363 = vmatpush.bf16.msra.mxu0 %v1310
        %1364 = vmatmul.bf16.gmra.mxu0 %v1333
        %v1365 = vpop.f32.mrf.mxu0
        %v1366 = vadd.f32 0.0, %v1365
        %v1367 = vpop.f32.mrf.mxu0
        %v1368 = vadd.f32 0.0, %v1367
        %1369 = vmatmul.bf16.gmra.mxu0 %v1334
        %v1370 = vpop.f32.mrf.mxu0
        %v1371 = vadd.f32 0.0, %v1370
        %v1372 = vpop.f32.mrf.mxu0
        %v1373 = vadd.f32 0.0, %v1372
        %1374 = vdwg.mxu0
        %v1375 = vld [vmem:[%s9] sm:$0xf]
        %v1376 = vld [vmem:[%s9 + $0x4] sm:$0xf]
        %v1377 = vld [vmem:[%s9 + $0x8] sm:$0xf]
        %v1378 = vld [vmem:[%s9 + $0xc] sm:$0xf]
        %v1379 = vpack.c.bf16 %v1349, %v1347
        %v1380 = vpack.c.bf16 %v1368, %v1366
        %v1381 = vpack.c.bf16 %v1354, %v1352
        %v1382 = vpack.c.bf16 %v1373, %v1371
        %v1383 = vld [vmem:[#allocation2 + $0x20] sm:$0xf]
        %v1384 = vld [vmem:[#allocation2 + $0x24] sm:$0xf]
        %v1385 = vld [vmem:[#allocation2 + $0x28] sm:$0xf]
        %v1386 = vld [vmem:[#allocation2 + $0x2c] sm:$0xf]
        %v1387 = vld [vmem:[#allocation2 + $0x30] sm:$0xf]
        %v1388 = vld [vmem:[#allocation2 + $0x34] sm:$0xf]
        %v1389 = vld [vmem:[#allocation2 + $0x38] sm:$0xf]
        %v1390 = vld [vmem:[#allocation2 + $0x3c] sm:$0xf]
        %v1395 = vunpack.c.l.b16 %v1383
        %v1396 = vunpack.c.l.b16 %v1384
        %v1397 = vunpack.c.l.b16 %v1385
        %v1398 = vunpack.c.l.b16 %v1386
        %v1399 = vpack.c.b16 %v1396, %v1395
        %v1400 = vpack.c.b16 %v1398, %v1397
        %1403 = vxpose.xlu0.c.b16.start [1/8] %v1399, 128
        %1404 = vxpose.xlu0.c.b16.cont [2/8] %v1400, 128
        %1405 = vxpose.xlu0.c.b16.cont [3/8] 0, 128
        %1406 = vxpose.xlu0.c.b16.cont [4/8] 0, 128
        %1407 = vxpose.xlu0.c.b16.cont [5/8] 0, 128
        %1408 = vxpose.xlu0.c.b16.cont [6/8] 0, 128
        %1409 = vxpose.xlu0.c.b16.cont [7/8] 0, 128
        %1410 = vxpose.xlu0.c.b16.end [8/8] 0, 128
        %v1411 = vpop.trf.xlu0
        %v1412 = vpop.trf.xlu0
        %v1413 = vpop.trf.xlu0
        %v1414 = vpop.trf.xlu0
        %v1415 = vpop.trf.xlu0
        %v1416 = vpop.trf.xlu0
        %v1417 = vpop.trf.xlu0
        %v1418 = vpop.trf.xlu0
        %v1420 = vsel %vm890, %v1411, 0
        %v1423 = vsel %vm890, %v1412, 0
        %v1426 = vsel %vm890, %v1413, 0
        %v1429 = vsel %vm890, %v1414, 0
        %v1432 = vsel %vm890, %v1415, 0
        %v1435 = vsel %vm890, %v1416, 0
        %v1438 = vsel %vm890, %v1417, 0
        %v1441 = vsel %vm890, %v1418, 0
        %1443 = vmatpush.bf16.msra.mxu0 0
        %1444 = vmatpush.bf16.msra.mxu0 0
        %1445 = vmatpush.bf16.msra.mxu0 0
        %1446 = vmatpush.bf16.msra.mxu0 0
        %1447 = vmatpush.bf16.msra.mxu0 0
        %1448 = vmatpush.bf16.msra.mxu0 0
        %1449 = vmatpush.bf16.msra.mxu0 %v1105
        %1450 = vmatpush.bf16.msra.mxu0 %v1103
        %1451 = vmatmul.bf16.gmra.mxu0 %v1420
        %v1452 = vpop.f32.mrf.mxu0
        %v1453 = vadd.f32 0.0, %v1452
        %v1454 = vpop.f32.mrf.mxu0
        %v1455 = vadd.f32 0.0, %v1454
        %1456 = vmatmul.bf16.gmra.mxu0 %v1423
        %v1457 = vpop.f32.mrf.mxu0
        %v1458 = vadd.f32 0.0, %v1457
        %v1459 = vpop.f32.mrf.mxu0
        %v1460 = vadd.f32 0.0, %v1459
        %1461 = vmatmul.bf16.gmra.mxu0 %v1426
        %v1462 = vpop.f32.mrf.mxu0
        %v1463 = vadd.f32 0.0, %v1462
        %v1464 = vpop.f32.mrf.mxu0
        %v1465 = vadd.f32 0.0, %v1464
        %1466 = vmatmul.bf16.gmra.mxu0 %v1429
        %v1467 = vpop.f32.mrf.mxu0
        %v1468 = vadd.f32 0.0, %v1467
        %v1469 = vpop.f32.mrf.mxu0
        %v1470 = vadd.f32 0.0, %v1469
        %1471 = vmatmul.bf16.gmra.mxu0 %v1432
        %v1472 = vpop.f32.mrf.mxu0
        %v1473 = vadd.f32 0.0, %v1472
        %v1474 = vpop.f32.mrf.mxu0
        %v1475 = vadd.f32 0.0, %v1474
        %1476 = vmatmul.bf16.gmra.mxu0 %v1435
        %v1477 = vpop.f32.mrf.mxu0
        %v1478 = vadd.f32 0.0, %v1477
        %v1479 = vpop.f32.mrf.mxu0
        %v1480 = vadd.f32 0.0, %v1479
        %1481 = vmatmul.bf16.gmra.mxu0 %v1438
        %v1482 = vpop.f32.mrf.mxu0
        %v1483 = vadd.f32 0.0, %v1482
        %v1484 = vpop.f32.mrf.mxu0
        %v1485 = vadd.f32 0.0, %v1484
        %1486 = vmatmul.bf16.gmra.mxu0 %v1441
        %v1487 = vpop.f32.mrf.mxu0
        %v1488 = vadd.f32 0.0, %v1487
        %v1489 = vpop.f32.mrf.mxu0
        %v1490 = vadd.f32 0.0, %v1489
        %1491 = vdwg.mxu0
        %1492 = vmatpush.bf16.msra.mxu0 0
        %1493 = vmatpush.bf16.msra.mxu0 0
        %1494 = vmatpush.bf16.msra.mxu0 0
        %1495 = vmatpush.bf16.msra.mxu0 0
        %1496 = vmatpush.bf16.msra.mxu0 0
        %1497 = vmatpush.bf16.msra.mxu0 0
        %1498 = vmatpush.bf16.msra.mxu0 %v1106
        %1499 = vmatpush.bf16.msra.mxu0 %v1104
        %1500 = vmatmul.bf16.gmra.mxu0 %v1420
        %v1501 = vpop.f32.mrf.mxu0
        %v1502 = vadd.f32 0.0, %v1501
        %v1503 = vpop.f32.mrf.mxu0
        %v1504 = vadd.f32 0.0, %v1503
        %1505 = vmatmul.bf16.gmra.mxu0 %v1423
        %v1506 = vpop.f32.mrf.mxu0
        %v1507 = vadd.f32 0.0, %v1506
        %v1508 = vpop.f32.mrf.mxu0
        %v1509 = vadd.f32 0.0, %v1508
        %1510 = vmatmul.bf16.gmra.mxu0 %v1426
        %v1511 = vpop.f32.mrf.mxu0
        %v1512 = vadd.f32 0.0, %v1511
        %v1513 = vpop.f32.mrf.mxu0
        %v1514 = vadd.f32 0.0, %v1513
        %1515 = vmatmul.bf16.gmra.mxu0 %v1429
        %v1516 = vpop.f32.mrf.mxu0
        %v1517 = vadd.f32 0.0, %v1516
        %v1518 = vpop.f32.mrf.mxu0
        %v1519 = vadd.f32 0.0, %v1518
        %1520 = vmatmul.bf16.gmra.mxu0 %v1432
        %v1521 = vpop.f32.mrf.mxu0
        %v1522 = vadd.f32 0.0, %v1521
        %v1523 = vpop.f32.mrf.mxu0
        %v1524 = vadd.f32 0.0, %v1523
        %1525 = vmatmul.bf16.gmra.mxu0 %v1435
        %v1526 = vpop.f32.mrf.mxu0
        %v1527 = vadd.f32 0.0, %v1526
        %v1528 = vpop.f32.mrf.mxu0
        %v1529 = vadd.f32 0.0, %v1528
        %1530 = vmatmul.bf16.gmra.mxu0 %v1438
        %v1531 = vpop.f32.mrf.mxu0
        %v1532 = vadd.f32 0.0, %v1531
        %v1533 = vpop.f32.mrf.mxu0
        %v1534 = vadd.f32 0.0, %v1533
        %1535 = vmatmul.bf16.gmra.mxu0 %v1441
        %v1536 = vpop.f32.mrf.mxu0
        %v1537 = vadd.f32 0.0, %v1536
        %v1538 = vpop.f32.mrf.mxu0
        %v1539 = vadd.f32 0.0, %v1538
        %1540 = vdwg.mxu0
        %v1541 = vpack.c.bf16 %v1455, %v1453
        %v1542 = vpack.c.bf16 %v1504, %v1502
        %v1543 = vpack.c.bf16 %v1460, %v1458
        %v1544 = vpack.c.bf16 %v1509, %v1507
        %v1545 = vpack.c.bf16 %v1465, %v1463
        %v1546 = vpack.c.bf16 %v1514, %v1512
        %v1547 = vpack.c.bf16 %v1470, %v1468
        %v1548 = vpack.c.bf16 %v1519, %v1517
        %v1549 = vpack.c.bf16 %v1475, %v1473
        %v1550 = vpack.c.bf16 %v1524, %v1522
        %v1551 = vpack.c.bf16 %v1480, %v1478
        %v1552 = vpack.c.bf16 %v1529, %v1527
        %v1553 = vpack.c.bf16 %v1485, %v1483
        %v1554 = vpack.c.bf16 %v1534, %v1532
        %v1555 = vpack.c.bf16 %v1490, %v1488
        %v1556 = vpack.c.bf16 %v1539, %v1537
        %v1561 = vunpack.c.l.b16 %v1387
        %v1562 = vunpack.c.l.b16 %v1388
        %v1563 = vunpack.c.l.b16 %v1389
        %v1564 = vunpack.c.l.b16 %v1390
        %v1565 = vpack.c.b16 %v1562, %v1561
        %v1566 = vpack.c.b16 %v1564, %v1563
        %1569 = vmatpush.bf16.msra.mxu0 %v1555
        %1570 = vmatpush.bf16.msra.mxu0 %v1553
        %1571 = vmatpush.bf16.msra.mxu0 %v1551
        %1572 = vmatpush.bf16.msra.mxu0 %v1549
        %1573 = vmatpush.bf16.msra.mxu0 %v1547
        %1574 = vmatpush.bf16.msra.mxu0 %v1545
        %1575 = vmatpush.bf16.msra.mxu0 %v1543
        %1576 = vmatpush.bf16.msra.mxu0 %v1541
        %1577 = vmatmul.bf16.gmra.mxu0 %v1565
        %v1578 = vpop.f32.mrf.mxu0
        %v1579 = vadd.f32 0.0, %v1578
        %v1580 = vpop.f32.mrf.mxu0
        %v1581 = vadd.f32 0.0, %v1580
        %1582 = vmatmul.bf16.gmra.mxu0 %v1566
        %v1583 = vpop.f32.mrf.mxu0
        %v1584 = vadd.f32 0.0, %v1583
        %v1585 = vpop.f32.mrf.mxu0
        %v1586 = vadd.f32 0.0, %v1585
        %1587 = vdwg.mxu0
        %1588 = vmatpush.bf16.msra.mxu0 %v1556
        %1589 = vmatpush.bf16.msra.mxu0 %v1554
        %1590 = vmatpush.bf16.msra.mxu0 %v1552
        %1591 = vmatpush.bf16.msra.mxu0 %v1550
        %1592 = vmatpush.bf16.msra.mxu0 %v1548
        %1593 = vmatpush.bf16.msra.mxu0 %v1546
        %1594 = vmatpush.bf16.msra.mxu0 %v1544
        %1595 = vmatpush.bf16.msra.mxu0 %v1542
        %1596 = vmatmul.bf16.gmra.mxu0 %v1565
        %v1597 = vpop.f32.mrf.mxu0
        %v1598 = vadd.f32 0.0, %v1597
        %v1599 = vpop.f32.mrf.mxu0
        %v1600 = vadd.f32 0.0, %v1599
        %1601 = vmatmul.bf16.gmra.mxu0 %v1566
        %v1602 = vpop.f32.mrf.mxu0
        %v1603 = vadd.f32 0.0, %v1602
        %v1604 = vpop.f32.mrf.mxu0
        %v1605 = vadd.f32 0.0, %v1604
        %1606 = vdwg.mxu0
        %v1607 = vld [vmem:[%s10] sm:$0xf]
        %v1608 = vld [vmem:[%s10 + $0x4] sm:$0xf]
        %v1609 = vld [vmem:[%s10 + $0x8] sm:$0xf]
        %v1610 = vld [vmem:[%s10 + $0xc] sm:$0xf]
        %v1611 = vpack.c.bf16 %v1581, %v1579
        %v1612 = vpack.c.bf16 %v1600, %v1598
        %v1613 = vpack.c.bf16 %v1586, %v1584
        %v1614 = vpack.c.bf16 %v1605, %v1603
        %v1619 = vunpack.c.l.b16 %v1607
        %v1620 = vunpack.c.l.b16 %v1608
        %v1621 = vunpack.c.l.b16 %v1609
        %v1622 = vunpack.c.l.b16 %v1610
        %v1623 = vpack.c.b16 %v1620, %v1619
        %v1624 = vpack.c.b16 %v1622, %v1621
        %v1626 = vsel %vm890, %v1623, 0
        %v1629 = vsel %vm890, %v1624, 0
        %1631 = vmatpush.bf16.msra.mxu0 0
        %1632 = vmatpush.bf16.msra.mxu0 0
        %1633 = vmatpush.bf16.msra.mxu0 0
        %1634 = vmatpush.bf16.msra.mxu0 0
        %1635 = vmatpush.bf16.msra.mxu0 0
        %1636 = vmatpush.bf16.msra.mxu0 0
        %1637 = vmatpush.bf16.msra.mxu0 %v1613
        %1638 = vmatpush.bf16.msra.mxu0 %v1611
        %1639 = vmatmul.bf16.gmra.mxu0 %v1626
        %v1640 = vpop.f32.mrf.mxu0
        %v1641 = vadd.f32 0.0, %v1640
        %v1642 = vpop.f32.mrf.mxu0
        %v1643 = vadd.f32 0.0, %v1642
        %1644 = vmatmul.bf16.gmra.mxu0 %v1629
        %v1645 = vpop.f32.mrf.mxu0
        %v1646 = vadd.f32 0.0, %v1645
        %v1647 = vpop.f32.mrf.mxu0
        %v1648 = vadd.f32 0.0, %v1647
        %1649 = vdwg.mxu0
        %1650 = vmatpush.bf16.msra.mxu0 0
        %1651 = vmatpush.bf16.msra.mxu0 0
        %1652 = vmatpush.bf16.msra.mxu0 0
        %1653 = vmatpush.bf16.msra.mxu0 0
        %1654 = vmatpush.bf16.msra.mxu0 0
        %1655 = vmatpush.bf16.msra.mxu0 0
        %1656 = vmatpush.bf16.msra.mxu0 %v1614
        %1657 = vmatpush.bf16.msra.mxu0 %v1612
        %1658 = vmatmul.bf16.gmra.mxu0 %v1626
        %v1659 = vpop.f32.mrf.mxu0
        %v1660 = vadd.f32 0.0, %v1659
        %v1661 = vpop.f32.mrf.mxu0
        %v1662 = vadd.f32 0.0, %v1661
        %1663 = vmatmul.bf16.gmra.mxu0 %v1629
        %v1664 = vpop.f32.mrf.mxu0
        %v1665 = vadd.f32 0.0, %v1664
        %v1666 = vpop.f32.mrf.mxu0
        %v1667 = vadd.f32 0.0, %v1666
        %1668 = vdwg.mxu0
        %v1673 = vunpack.c.l.b16 %v1375
        %v1674 = vunpack.c.l.b16 %v1376
        %v1675 = vunpack.c.l.b16 %v1377
        %v1676 = vunpack.c.l.b16 %v1378
        %v1677 = vpack.c.b16 %v1674, %v1673
        %v1678 = vpack.c.b16 %v1676, %v1675
        %v1680 = vsel %vm890, %v1677, 0
        %v1683 = vsel %vm890, %v1678, 0
        %1685 = vmatpush.bf16.msra.mxu0 0
        %1686 = vmatpush.bf16.msra.mxu0 0
        %1687 = vmatpush.bf16.msra.mxu0 0
        %1688 = vmatpush.bf16.msra.mxu0 0
        %1689 = vmatpush.bf16.msra.mxu0 0
        %1690 = vmatpush.bf16.msra.mxu0 0
        %1691 = vmatpush.bf16.msra.mxu0 %v1381
        %1692 = vmatpush.bf16.msra.mxu0 %v1379
        %1693 = vmatmul.bf16.gmra.mxu0 %v1680
        %v1694 = vpop.f32.mrf.mxu0
        %v1695 = vadd.f32 %v1641, %v1694
        %v1696 = vpop.f32.mrf.mxu0
        %v1697 = vadd.f32 %v1643, %v1696
        %1698 = vmatmul.bf16.gmra.mxu0 %v1683
        %v1699 = vpop.f32.mrf.mxu0
        %v1700 = vadd.f32 %v1646, %v1699
        %v1701 = vpop.f32.mrf.mxu0
        %v1702 = vadd.f32 %v1648, %v1701
        %1703 = vdwg.mxu0
        %1704 = vmatpush.bf16.msra.mxu0 0
        %1705 = vmatpush.bf16.msra.mxu0 0
        %1706 = vmatpush.bf16.msra.mxu0 0
        %1707 = vmatpush.bf16.msra.mxu0 0
        %1708 = vmatpush.bf16.msra.mxu0 0
        %1709 = vmatpush.bf16.msra.mxu0 0
        %1710 = vmatpush.bf16.msra.mxu0 %v1382
        %1711 = vmatpush.bf16.msra.mxu0 %v1380
        %1712 = vmatmul.bf16.gmra.mxu0 %v1680
        %v1713 = vpop.f32.mrf.mxu0
        %v1714 = vadd.f32 %v1660, %v1713
        %v1715 = vpop.f32.mrf.mxu0
        %v1716 = vadd.f32 %v1662, %v1715
        %1717 = vmatmul.bf16.gmra.mxu0 %v1683
        %v1718 = vpop.f32.mrf.mxu0
        %v1719 = vadd.f32 %v1665, %v1718
        %v1720 = vpop.f32.mrf.mxu0
        %v1721 = vadd.f32 %v1667, %v1720
        %1722 = vdwg.mxu0
        %v1723 = vld [vmem:[%s11] sm:$0xf]
        %v1724 = vld [vmem:[%s11 + $0x4] sm:$0xf]
        %v1725 = vld [vmem:[%s11 + $0x8] sm:$0xf]
        %v1726 = vld [vmem:[%s11 + $0xc] sm:$0xf]
        %v1731 = vunpack.c.l.b16 %v1723
        %v1732 = vunpack.c.l.b16 %v1724
        %v1733 = vunpack.c.l.b16 %v1725
        %v1734 = vunpack.c.l.b16 %v1726
        %v1735 = vpack.c.b16 %v1732, %v1731
        %v1736 = vpack.c.b16 %v1734, %v1733
        %v1738 = vsel %vm890, %v1735, 0
        %v1741 = vsel %vm890, %v1736, 0
        %1743 = vmatpush.bf16.msra.mxu0 0
        %1744 = vmatpush.bf16.msra.mxu0 0
        %1745 = vmatpush.bf16.msra.mxu0 0
        %1746 = vmatpush.bf16.msra.mxu0 0
        %1747 = vmatpush.bf16.msra.mxu0 0
        %1748 = vmatpush.bf16.msra.mxu0 0
        %1749 = vmatpush.bf16.msra.mxu0 %v1149
        %1750 = vmatpush.bf16.msra.mxu0 %v1147
        %1751 = vmatmul.bf16.gmra.mxu0 %v1738
        %v1752 = vpop.f32.mrf.mxu0
        %v1753 = vadd.f32 0.0, %v1752
        %v1754 = vpop.f32.mrf.mxu0
        %v1755 = vadd.f32 0.0, %v1754
        %1756 = vmatmul.bf16.gmra.mxu0 %v1741
        %v1757 = vpop.f32.mrf.mxu0
        %v1758 = vadd.f32 0.0, %v1757
        %v1759 = vpop.f32.mrf.mxu0
        %v1760 = vadd.f32 0.0, %v1759
        %1761 = vdwg.mxu0
        %1762 = vmatpush.bf16.msra.mxu0 0
        %1763 = vmatpush.bf16.msra.mxu0 0
        %1764 = vmatpush.bf16.msra.mxu0 0
        %1765 = vmatpush.bf16.msra.mxu0 0
        %1766 = vmatpush.bf16.msra.mxu0 0
        %1767 = vmatpush.bf16.msra.mxu0 0
        %1768 = vmatpush.bf16.msra.mxu0 %v1150
        %1769 = vmatpush.bf16.msra.mxu0 %v1148
        %1770 = vmatmul.bf16.gmra.mxu0 %v1738
        %v1771 = vpop.f32.mrf.mxu0
        %v1772 = vadd.f32 0.0, %v1771
        %v1773 = vpop.f32.mrf.mxu0
        %v1774 = vadd.f32 0.0, %v1773
        %1775 = vmatmul.bf16.gmra.mxu0 %v1741
        %v1776 = vpop.f32.mrf.mxu0
        %v1777 = vadd.f32 0.0, %v1776
        %v1778 = vpop.f32.mrf.mxu0
        %v1779 = vadd.f32 0.0, %v1778
        %1780 = vdwg.mxu0
        %v1781 = vadd.f32 %v1695, %v1753
        %v1782 = vadd.f32 %v1714, %v1772
        %v1783 = vadd.f32 %v1697, %v1755
        %v1784 = vadd.f32 %v1716, %v1774
        %v1785 = vadd.f32 %v1700, %v1758
        %v1786 = vadd.f32 %v1719, %v1777
        %v1787 = vadd.f32 %v1702, %v1760
        %v1788 = vadd.f32 %v1721, %v1779
        %v1789 = vld [vmem:[%s12] sm:$0xff]
        %v1790 = vld [vmem:[%s12 + $0x8] sm:$0xff]
        %v1791 = vld [vmem:[%s12 + $0x10] sm:$0xff]
        %v1792 = vld [vmem:[%s12 + $0x18] sm:$0xff]
        %1794 = vset.pattern.permute.xlu0 0
        %1795 = vperm.xlu0 %1794, %v1789
        %v1796 = vpop.permute.xlu0 %1795
        %1799 = vset.pattern.permute.xlu0 0
        %1800 = vperm.xlu0 %1799, %v1790
        %v1801 = vpop.permute.xlu0 %1800
        %1804 = vset.pattern.permute.xlu0 0
        %1805 = vperm.xlu0 %1804, %v1791
        %v1806 = vpop.permute.xlu0 %1805
        %1809 = vset.pattern.permute.xlu0 0
        %1810 = vperm.xlu0 %1809, %v1792
        %v1811 = vpop.permute.xlu0 %1810
        %v1813 = vadd.f32 %v1781, %v1796
        %v1814 = vadd.f32 %v1782, %v1796
        %v1815 = vadd.f32 %v1783, %v1801
        %v1816 = vadd.f32 %v1784, %v1801
        %v1817 = vadd.f32 %v1785, %v1806
        %v1818 = vadd.f32 %v1786, %v1806
        %v1819 = vadd.f32 %v1787, %v1811
        %v1820 = vadd.f32 %v1788, %v1811
        %v1821 = vmax.f32 %v1813, 0.0
        %v1822 = vmax.f32 %v1814, 0.0
        %v1823 = vmax.f32 %v1815, 0.0
        %v1824 = vmax.f32 %v1816, 0.0
        %v1825 = vmax.f32 %v1817, 0.0
        %v1826 = vmax.f32 %v1818, 0.0
        %v1827 = vmax.f32 %v1819, 0.0
        %v1828 = vmax.f32 %v1820, 0.0
        %1829 = vst [vmem:[%s484] sm:$0xff] %v1821
        %1830 = vst [vmem:[%s484 + $0x8] sm:$0xff] %v1822
        %1831 = vst [vmem:[%s484 + $0x10] sm:$0xff] %v1823
        %1832 = vst [vmem:[%s484 + $0x18] sm:$0xff] %v1824
        %1833 = vst [vmem:[%s484 + $0x20] sm:$0xff] %v1825
        %1834 = vst [vmem:[%s484 + $0x28] sm:$0xff] %v1826
        %1835 = vst [vmem:[%s484 + $0x30] sm:$0xff] %v1827
        %1836 = vst [vmem:[%s484 + $0x38] sm:$0xff] %v1828
        %s1837 = sand.u32 %s339, 1
        %s1838 = scalar_lea.sflag [#allocation4], %s1837
        %s1839 = sand.u32 %s339, 1
        %s1840 = smul.addr %s1839, 64
        %s1841 = scalar_lea.vmem [#allocation3], %s1840
        // Predicated region
        $region77: #{tpu_custom_call.1} parent=71 // pred_check
          %p1842 = pneg %p349
        $region78: #{tpu_custom_call.1} parent=71 // pred_check_branch
          %1844 = sbr.rel (%p1842) target = $region80
        $region79: #{tpu_custom_call.1} parent=71 // pred_region
          %s1845 = smul.u32 2, %s32
          %1847 = vsyncadd %s1838, 0
          %s1848 = smul.addr %s31, 8
          %s1849 = sadd.s32 %s1845, %s1848
          %s1850 = smul.addr %s1849, 8
          %s1851 = scalar_lea.hbm %s13, %s1850
          %s1852 = sshll.u32 %s1841, 4
          %s1853 = int_to_ptr.vmem [resolvable:$true] %s1852
          %s1854 = sshll.u32 %s1851, 4
          %s1855 = int_to_ptr.hbm [resolvable:$true] %s1854
          %1860 = dma.vmem_to_hbm [thread:$0]  %s1853, 1024, %s1855, %s1838, 256, 256, 16
        $region80: #{tpu_custom_call.1} parent=71 // pred_fallthru
          _
      $region72: #{tpu_custom_call.1} parent=5 // pred_fallthru
        _
      %p1861 = scmp.le.s32.totalorder 2, %s22
      // Predicated region
      $region81: #{tpu_custom_call.1} parent=5 // pred_check
        %p1862 = pneg %p1861
      $region82: #{tpu_custom_call.1} parent=5 // pred_check_branch
        %1864 = sbr.rel (%p1862) target = $region84
      $region83: #{tpu_custom_call.1} parent=5 // pred_region
        %s1865 = ssub.s32 %s22, 2
        // Predicated region
        $region85: #{tpu_custom_call.1} parent=83 // pred_check
          %p1866 = pneg %p355
        $region86: #{tpu_custom_call.1} parent=83 // pred_check_branch
          %1868 = sbr.rel (%p1866) target = $region88
        $region87: #{tpu_custom_call.1} parent=83 // pred_region
          %s1869 = sand.u32 %s340, 1
          %s1870 = scalar_lea.sflag [#allocation4], %s1869
          %s1871 = sand.u32 %s340, 1
          %s1872 = smul.addr %s1871, 64
          %s1873 = scalar_lea.vmem [#allocation3], %s1872
          %1875 = dma.done %s1870, 1024
        $region88: #{tpu_custom_call.1} parent=83 // pred_fallthru
          _
      $region84: #{tpu_custom_call.1} parent=5 // pred_fallthru
        _
    $region6: #{tpu_custom_call.1} parent=1 // loop_footer
      %s26 = sadd.s32 1, %s22
    $region7: #{tpu_custom_call.1} parent=1 // loop_footer_branch
      %21 = sbr.rel target = $region3
    $region8: #{tpu_custom_call.1} parent=1 // loop_exit
      _
    %1876 = vsyncpa [#allocation4], 1
    %s1877 = scalar_lea.sflag [#allocation4], 1
    %1878 = vsyncpa %s1877, 1

</llo_original>
